<compile_context>
chip_gen: v6e
topology: v6e:2x2x1
jax: 0.10.0
libtpu: 0.0.40
codegen_flags: <defaults>
</compile_context>

<pallas_src>
import jax
import jax.numpy as jnp
import numpy as np
from jax.experimental import pallas as pl
from jax.experimental.pallas import tpu as pltpu


def _round_up(x, m):
    return ((x + m - 1) // m) * m


def _lstm_kernel(x_ref, h0_ref, c0_ref, w_ih_ref, w_hh_ref, b_ref,
                 out_ref, hn_ref, cn_ref):
    """One grid step = one (batch_block, t_chunk) tile of the sequence.

    x_ref   : (Tc, TB, I)    time-major input block
    h0/c0   : (TB, Hp)       initial state (used only on the first time chunk)
    w_ih    : (I, 4*Hp)      gate-packed, lane-aligned (padding zero-filled)
    w_hh    : (Hp, 4*Hp)
    b       : (1, 4*Hp)      b_ih + b_hh
    out_ref : (TB, Tc*Hp)    round(sigmoid(h_t)), one Hp-wide lane group per step
    hn/cn   : (TB, Hp)       f32 resident carry (same block index for every chunk)
    """
    n = pl.program_id(1)  # time-chunk index (sequential / "arbitrary" axis)

    @pl.when(n == 0)
    def _():
        hn_ref[...] = h0_ref[...]
        cn_ref[...] = c0_ref[...]

    t_chunk, tb, in_dim = x_ref.shape
    hp = hn_ref.shape[-1]                 # lane-padded hidden size (multiple of 128)
    x_mm_dtype = w_ih_ref.dtype           # input-projection operand dtype
    h_mm_dtype = w_hh_ref.dtype           # recurrent-matmul operand dtype

    # ---- Input projection for the whole chunk, hoisted off the sequential path.
    # Time-major rows: step t owns the contiguous sublane range [t*TB, (t+1)*TB).
    x2d = x_ref[...].reshape(t_chunk * tb, in_dim).astype(x_mm_dtype)
    gx = jnp.dot(x2d, w_ih_ref[...], preferred_element_type=jnp.float32)
    gx = gx + b_ref[...]                                              # (Tc*TB, 4Hp)

    w_hh = w_hh_ref[...]

    # ---- Carry stays in values for the whole chunk (no per-step ref round-trips).
    h = hn_ref[...]                                                   # (TB, Hp) f32
    c = cn_ref[...]                                                   # (TB, Hp) f32

    hs = []
    # TODO(synk): switch to lax.fori_loop(..., unroll=4..8) + a VMEM stash if
    # t_chunk is ever raised above ~32 (vreg pressure of the full unroll).
    for t in range(t_chunk):
        gates = gx[t * tb:(t + 1) * tb, :] + jnp.dot(
            h.astype(h_mm_dtype), w_hh, preferred_element_type=jnp.float32)

        # Gate slices are whole 128-lane groups (Hp % 128 == 0).
        i_g = jax.nn.sigmoid(gates[:, 0 * hp:1 * hp])
        f_g = jax.nn.sigmoid(gates[:, 1 * hp:2 * hp])
        g_g = jnp.tanh(gates[:, 2 * hp:3 * hp])
        o_g = jax.nn.sigmoid(gates[:, 3 * hp:4 * hp])

        c = f_g * c + i_g * g_g
        h = o_g * jnp.tanh(c)
        hs.append(h)

    # Single carry writeback per chunk.
    hn_ref[...] = h
    cn_ref[...] = c

    # ---- Deferred post-processing: chunk-wide sigmoid/round off the serial path,
    # lane-aligned concat (each piece is Hp = k*128 lanes), one dense block store.
    h_cat = jnp.concatenate(hs, axis=-1)                              # (TB, Tc*Hp)
    out_ref[...] = jnp.round(jax.nn.sigmoid(h_cat)).astype(out_ref.dtype)


def _pack_gate_weight(w, hp):
    """PyTorch (4H, K) gate-stacked weight -> (K, 4*Hp), zero-padded, lane-aligned."""
    four_h, k = w.shape
    h = four_h // 4
    w4 = w.reshape(4, h, k)
    w4p = jnp.zeros((4, hp, k), w.dtype).at[:, :h, :].set(w4)
    return jnp.transpose(w4p, (2, 0, 1)).reshape(k, 4 * hp)


def _vmem_bytes(tb, tc, in_dim, hp, x_bytes, w_bytes, out_bytes, weight_bufs):
    """Rough per-grid-step VMEM estimate (blocks + in-kernel temporaries)."""
    b = 0
    b += 2 * tc * tb * in_dim * x_bytes                 # x block, double-buffered
    b += 2 * tb * tc * hp * out_bytes                   # out block, double-buffered
    b += 4 * 2 * tb * hp * 4                            # h0/c0/hn/cn blocks
    b += weight_bufs * ((in_dim + hp) * 4 * hp + 4 * hp) * w_bytes   # weights + bias
    b += tc * tb * 4 * hp * 4                           # gx temporary (f32)
    b += tc * tb * hp * 4                               # stashed per-step h values
    return b


def lstm_forward(x, hidden, params, *, t_chunk=None, batch_block=None,
                 matmul_dtype=jnp.bfloat16, hh_matmul_dtype=None,
                 output_dtype=None):
    """x: (B, T, I) batch_first; hidden = (h0, c0), each (1, B, H).

    matmul_dtype     : operand dtype for the input projection / weights
                       (bf16 default: ~3x MXU throughput, half weight VMEM).
    hh_matmul_dtype  : operand dtype for the recurrent h @ W_hh (None -> matmul_dtype;
                       pass jnp.float32 for very long sequences to avoid bf16 drift).
    output_dtype     : returned output dtype (None -> x.dtype).  The kernel always
                       writes bf16 (values are exactly 0.0/1.0, so this is lossless).
    """
    w_ih, w_hh, b_ih, b_hh = params
    h0, c0 = hidden
    B, T, I = x.shape
    H = w_hh.shape[1]
    Hp = _round_up(H, 128)                     # lane-aligned hidden size
    if hh_matmul_dtype is None:
        hh_matmul_dtype = matmul_dtype

    # ---- Batch block: shard the "parallel" axis across both v7x TensorCores when
    # the batch is big enough; must stay a sublane multiple (or the whole batch).
    if batch_block is None:
        batch_block = B
        if B >= 16 and B % 2 == 0 and (B // 2) % 8 == 0:
            batch_block = B // 2
    if B % batch_block != 0 or (batch_block % 8 != 0 and batch_block != B):
        batch_block = B

    x_bytes = jnp.dtype(x.dtype).itemsize
    w_bytes = jnp.dtype(matmul_dtype).itemsize

    # Rounded outputs are exactly 0/1 -> bf16 writeback is lossless and halves the
    # dominant HBM write (guarded on sublane alignment of the output block).
    if batch_block == B or batch_block % 16 == 0:
        kernel_out_dtype = jnp.bfloat16
    else:
        kernel_out_dtype = jnp.float32
    out_bytes = jnp.dtype(kernel_out_dtype).itemsize

    # Single-buffer the constant-index weight specs once they are big enough for
    # double-buffering to matter (v7x VMEM); tiny weights keep the safe default.
    weight_hbm_bytes = ((I + Hp) * 4 * Hp + 4 * Hp) * w_bytes
    single_buffer_weights = weight_hbm_bytes > (8 << 20)
    weight_bufs = 1 if single_buffer_weights else 2

    # ---- Time chunk: largest divisor of T (capped for the unrolled loop) whose
    # chunk-dependent VMEM footprint fits the budget.
    if t_chunk is None:
        t_chunk = 1
        for tc in range(1, min(T, 32) + 1):
            if T % tc:
                continue
            if _vmem_bytes(batch_block, tc, I, Hp, x_bytes, w_bytes, out_bytes,
                           weight_bufs) <= (40 << 20):
                t_chunk = tc
    t_chunk = min(t_chunk, T)
    if T % t_chunk != 0:
        t_chunk = T

    # ---- Pack / pad parameters (zero padding keeps padded lanes exactly 0 through
    # the recurrence; do not put nonzero values in padded gate columns).
    w_ih_p = _pack_gate_weight(w_ih, Hp).astype(matmul_dtype)            # (I, 4Hp)
    w_hh_t = _pack_gate_weight(w_hh, Hp)                                 # (H, 4Hp)
    w_hh_p = jnp.zeros((Hp, 4 * Hp), w_hh.dtype).at[:H, :].set(w_hh_t)
    w_hh_p = w_hh_p.astype(hh_matmul_dtype)                              # (Hp, 4Hp)
    b_sum = (b_ih + b_hh).astype(jnp.float32).reshape(4, H)
    bias_p = jnp.zeros((4, Hp), jnp.float32).at[:, :H].set(b_sum).reshape(1, 4 * Hp)

    h0_p = jnp.zeros((B, Hp), jnp.float32).at[:, :H].set(h0[0].astype(jnp.float32))
    c0_p = jnp.zeros((B, Hp), jnp.float32).at[:, :H].set(c0[0].astype(jnp.float32))

    # Cheap wrapper transpose of the (small-I) input so in-kernel per-step gate rows
    # and the chunk output store are dense.
    x_tm = jnp.transpose(x, (1, 0, 2))                                   # (T, B, I)

    grid = (B // batch_block, T // t_chunk)

    weight_spec_kwargs = (
        dict(pipeline_mode=pl.Buffered(1)) if single_buffer_weights else {})

    cp_kwargs = dict(dimension_semantics=("parallel", "arbitrary"))
    vmem_est = _vmem_bytes(batch_block, t_chunk, I, Hp, x_bytes, w_bytes,
                           out_bytes, weight_bufs)
    if vmem_est > (24 << 20):
        cp_kwargs["vmem_limit_bytes"] = min(int(vmem_est * 1.25) + (4 << 20), 96 << 20)

    out_p, h_n, c_n = pl.pallas_call(
        _lstm_kernel,
        out_shape=(
            jax.ShapeDtypeStruct((B, T * Hp), kernel_out_dtype),   # round(sigmoid(out))
            jax.ShapeDtypeStruct((B, Hp), jnp.float32),            # h_n (also the carry)
            jax.ShapeDtypeStruct((B, Hp), jnp.float32),            # c_n (also the carry)
        ),
        grid_spec=pltpu.PrefetchScalarGridSpec(
            num_scalar_prefetch=0,
            grid=grid,
            in_specs=[
                pl.BlockSpec((t_chunk, batch_block, I), lambda b, n: (n, b, 0)),   # x
                pl.BlockSpec((batch_block, Hp), lambda b, n: (b, 0)),              # h0
                pl.BlockSpec((batch_block, Hp), lambda b, n: (b, 0)),              # c0
                pl.BlockSpec((I, 4 * Hp), lambda b, n: (0, 0),
                             **weight_spec_kwargs),                                # W_ih^T
                pl.BlockSpec((Hp, 4 * Hp), lambda b, n: (0, 0),
                             **weight_spec_kwargs),                                # W_hh^T
                pl.BlockSpec((1, 4 * Hp), lambda b, n: (0, 0),
                             **weight_spec_kwargs),                                # bias
            ],
            out_specs=[
                pl.BlockSpec((batch_block, t_chunk * Hp), lambda b, n: (b, n)),    # out
                pl.BlockSpec((batch_block, Hp), lambda b, n: (b, 0)),              # h_n
                pl.BlockSpec((batch_block, Hp), lambda b, n: (b, 0)),              # c_n
            ],
        ),
        compiler_params=pltpu.CompilerParams(**cp_kwargs),
    )(x_tm, h0_p, c0_p, w_ih_p, w_hh_p, bias_p)

    # (B, T*Hp) -> (B, T, Hp) is a layout-free reshape; slice off the lane padding.
    out = out_p.reshape(B, T, Hp)[:, :, :H]
    out = out.astype(x.dtype if output_dtype is None else output_dtype)
    return out, (h_n[:, :H][None], c_n[:, :H][None])          # h_n/c_n: (1, B, H)


def _reference_lstm(x, hidden, params):
    """Pure-JAX reference matching torch.nn.LSTM (gate order i, f, g, o)."""
    w_ih, w_hh, b_ih, b_hh = params
    h, c = hidden[0][0], hidden[1][0]
    H = h.shape[-1]

    def step(carry, x_t):
        h, c = carry
        gates = x_t @ w_ih.T + h @ w_hh.T + b_ih + b_hh
        i = jax.nn.sigmoid(gates[:, 0 * H:1 * H])
        f = jax.nn.sigmoid(gates[:, 1 * H:2 * H])
        g = jnp.tanh(gates[:, 2 * H:3 * H])
        o = jax.nn.sigmoid(gates[:, 3 * H:4 * H])
        c = f * c + i * g
        h = o * jnp.tanh(c)
        return (h, c), h

    (h, c), outs = jax.lax.scan(step, (h, c), jnp.transpose(x, (1, 0, 2)))
    outs = jnp.transpose(outs, (1, 0, 2))
    return jnp.round(jax.nn.sigmoid(outs)), (h[None], c[None])


if __name__ == "__main__":
    B, T, I, H = 2, 16, 16, 32   # T=16 with a smaller chunk exercises the carry

    # Deterministic parameter init (uniform(-1/sqrt(H), 1/sqrt(H)), like PyTorch).
    key = jax.random.PRNGKey(0)
    k_x, k_h, k_c, k1, k2, k3, k4 = jax.random.split(key, 7)
    bound = 1.0 / np.sqrt(H)
    w_ih = jax.random.uniform(k1, (4 * H, I), jnp.float32, -bound, bound)
    w_hh = jax.random.uniform(k2, (4 * H, H), jnp.float32, -bound, bound)
    b_ih = jax.random.uniform(k3, (4 * H,), jnp.float32, -bound, bound)
    b_hh = jax.random.uniform(k4, (4 * H,), jnp.float32, -bound, bound)
    params = (w_ih, w_hh, b_ih, b_hh)

    x = jax.random.normal(k_x, (B, T, I), jnp.float32)
    h0 = jax.random.normal(k_h, (1, B, H), jnp.float32)
    c0 = jax.random.normal(k_c, (1, B, H), jnp.float32)

    ref_out, (ref_h, ref_c) = _reference_lstm(x, (h0, c0), params)

    # f32 matmul path (and a sub-T chunk to exercise the cross-chunk carry):
    # must match the PyTorch/JAX reference tightly.
    out, (h_n, c_n) = lstm_forward(x, (h0, c0), params, t_chunk=8,
                                   matmul_dtype=jnp.float32)
    jax.block_until_ready((out, h_n, c_n))
    assert np.allclose(np.asarray(out), np.asarray(ref_out), atol=1e-5)
    assert np.allclose(np.asarray(h_n), np.asarray(ref_h), atol=1e-4)
    assert np.allclose(np.asarray(c_n), np.asarray(ref_c), atol=1e-4)

    # Default path: bf16 matmul operands (fast MXU), f32 accumulation/carry,
    # auto-picked t_chunk; loose check (bf16 rounding).
    out_bf, (h_bf, c_bf) = lstm_forward(x, (h0, c0), params)
    jax.block_until_ready((out_bf, h_bf, c_bf))
    o = np.asarray(out_bf)
    assert np.all((o == 0.0) | (o == 1.0))
    assert np.all(np.isfinite(np.asarray(h_bf)))
    assert np.allclose(np.asarray(h_bf), np.asarray(ref_h), atol=1e-1)

    print("KERNEL_OK")
</pallas_src>

<mosaic_0001>
module attributes {stable_mosaic.version = 11 : i64} {
  func.func @_lstm_kernel(%arg0: i32, %arg1: i32, %arg2: memref<8x2x16xf32, #tpu.memory_space<vmem>>, %arg3: memref<2x128xf32, #tpu.memory_space<vmem>>, %arg4: memref<2x128xf32, #tpu.memory_space<vmem>>, %arg5: memref<16x512xf32, #tpu.memory_space<vmem>>, %arg6: memref<128x512xf32, #tpu.memory_space<vmem>>, %arg7: memref<1x512xf32, #tpu.memory_space<vmem>>, %arg8: memref<2x1024xbf16, #tpu.memory_space<vmem>>, %arg9: memref<2x128xf32, #tpu.memory_space<vmem>>, %arg10: memref<2x128xf32, #tpu.memory_space<vmem>>) attributes {dimension_semantics = [#tpu.dimension_semantics<parallel>, #tpu.dimension_semantics<arbitrary>], iteration_bounds = array<i64: 1, 2>, scalar_prefetch = 0 : i64, scratch_operands = 0 : i64, tpu.core_type = #tpu.core_type<tc>, window_params = [{transform_indices = @transform_0, window_bounds = array<i64: 8, 2, 16>}, {transform_indices = @transform_1, window_bounds = array<i64: 2, 128>}, {transform_indices = @transform_2, window_bounds = array<i64: 2, 128>}, {pipeline_mode = #tpu.pipeline_mode<synchronous>, transform_indices = @transform_3, window_bounds = array<i64: 16, 512>}, {pipeline_mode = #tpu.pipeline_mode<synchronous>, transform_indices = @transform_4, window_bounds = array<i64: 128, 512>}, {pipeline_mode = #tpu.pipeline_mode<synchronous>, transform_indices = @transform_5, window_bounds = array<i64: 1, 512>}, {transform_indices = @transform_6, window_bounds = array<i64: 2, 1024>}, {transform_indices = @transform_7, window_bounds = array<i64: 2, 128>}, {transform_indices = @transform_8, window_bounds = array<i64: 2, 128>}]} {
    %c0_i32 = arith.constant 0 : i32
    %0 = arith.cmpi eq, %arg1, %c0_i32 : i32
    %1 = arith.extui %0 : i1 to i32
    %c0_i32_0 = arith.constant 0 : i32
    %2 = arith.cmpi ne, %1, %c0_i32_0 : i32
    scf.if %2 {
      %c0_52 = arith.constant 0 : index
      %c0_53 = arith.constant 0 : index
      %248 = vector.load %arg3[%c0_52, %c0_53] : memref<2x128xf32, #tpu.memory_space<vmem>>, vector<2x128xf32>
      %c0_54 = arith.constant 0 : index
      %c0_55 = arith.constant 0 : index
      %249 = vector.load %arg9[%c0_54, %c0_55] : memref<2x128xf32, #tpu.memory_space<vmem>>, vector<2x128xf32>
      tpu.vector_store %arg9[%c0_54, %c0_55], %248 {strides = array<i32>} : memref<2x128xf32, #tpu.memory_space<vmem>>, vector<2x128xf32>,
      %c0_56 = arith.constant 0 : index
      %c0_57 = arith.constant 0 : index
      %250 = vector.load %arg4[%c0_56, %c0_57] : memref<2x128xf32, #tpu.memory_space<vmem>>, vector<2x128xf32>
      %c0_58 = arith.constant 0 : index
      %c0_59 = arith.constant 0 : index
      %251 = vector.load %arg10[%c0_58, %c0_59] : memref<2x128xf32, #tpu.memory_space<vmem>>, vector<2x128xf32>
      tpu.vector_store %arg10[%c0_58, %c0_59], %250 {strides = array<i32>} : memref<2x128xf32, #tpu.memory_space<vmem>>, vector<2x128xf32>,
    } else {
    }
    %c0 = arith.constant 0 : index
    %c0_1 = arith.constant 0 : index
    %c0_2 = arith.constant 0 : index
    %3 = vector.load %arg2[%c0, %c0_1, %c0_2] : memref<8x2x16xf32, #tpu.memory_space<vmem>>, vector<8x2x16xf32>
    %4 = vector.shape_cast %3 : vector<8x2x16xf32> to vector<16x16xf32>
    %c0_3 = arith.constant 0 : index
    %c0_4 = arith.constant 0 : index
    %5 = vector.load %arg5[%c0_3, %c0_4] : memref<16x512xf32, #tpu.memory_space<vmem>>, vector<16x512xf32>
    %cst = arith.constant dense<0.000000e+00> : vector<16x512xf32>
    %6 = tpu.matmul %4, %5, %cst {dimension_numbers = #tpu.dot_dimension_numbers<[1], [0], [0], [1], [0, 0, 1, 1], [], []>} : vector<16x16xf32>, vector<16x512xf32>, vector<16x512xf32> -> vector<16x512xf32>
    %c0_5 = arith.constant 0 : index
    %c0_6 = arith.constant 0 : index
    %7 = vector.load %arg7[%c0_5, %c0_6] : memref<1x512xf32, #tpu.memory_space<vmem>>, vector<1x512xf32>
    %8 = vector.broadcast %7 : vector<1x512xf32> to vector<16x512xf32>
    %9 = arith.addf %6, %8 : vector<16x512xf32>
    %c0_7 = arith.constant 0 : index
    %c0_8 = arith.constant 0 : index
    %10 = vector.load %arg6[%c0_7, %c0_8] : memref<128x512xf32, #tpu.memory_space<vmem>>, vector<128x512xf32>
    %c0_9 = arith.constant 0 : index
    %c0_10 = arith.constant 0 : index
    %11 = vector.load %arg9[%c0_9, %c0_10] : memref<2x128xf32, #tpu.memory_space<vmem>>, vector<2x128xf32>
    %c0_11 = arith.constant 0 : index
    %c0_12 = arith.constant 0 : index
    %12 = vector.load %arg10[%c0_11, %c0_12] : memref<2x128xf32, #tpu.memory_space<vmem>>, vector<2x128xf32>
    %13 = vector.extract_strided_slice %9 {offsets = [0, 0], sizes = [2, 512], strides = [1, 1]} : vector<16x512xf32> to vector<2x512xf32>
    %cst_13 = arith.constant dense<0.000000e+00> : vector<2x512xf32>
    %14 = tpu.matmul %11, %10, %cst_13 {dimension_numbers = #tpu.dot_dimension_numbers<[1], [0], [0], [1], [0, 0, 1, 1], [], []>} : vector<2x128xf32>, vector<128x512xf32>, vector<2x512xf32> -> vector<2x512xf32>
    %15 = arith.addf %13, %14 : vector<2x512xf32>
    %16 = vector.extract_strided_slice %15 {offsets = [0, 0], sizes = [2, 128], strides = [1, 1]} : vector<2x512xf32> to vector<2x128xf32>
    %17 = arith.negf %16 : vector<2x128xf32>
    %18 = math.exp %17 : vector<2x128xf32>
    %cst_14 = arith.constant 1.000000e+00 : f32
    %19 = vector.broadcast %cst_14 : f32 to vector<2x128xf32>
    %20 = arith.addf %19, %18 : vector<2x128xf32>
    %21 = arith.divf %19, %20 : vector<2x128xf32>
    %22 = vector.extract_strided_slice %15 {offsets = [0, 128], sizes = [2, 128], strides = [1, 1]} : vector<2x512xf32> to vector<2x128xf32>
    %23 = arith.negf %22 : vector<2x128xf32>
    %24 = math.exp %23 : vector<2x128xf32>
    %cst_15 = arith.constant 1.000000e+00 : f32
    %25 = vector.broadcast %cst_15 : f32 to vector<2x128xf32>
    %26 = arith.addf %25, %24 : vector<2x128xf32>
    %27 = arith.divf %25, %26 : vector<2x128xf32>
    %28 = vector.extract_strided_slice %15 {offsets = [0, 256], sizes = [2, 128], strides = [1, 1]} : vector<2x512xf32> to vector<2x128xf32>
    %29 = math.tanh %28 : vector<2x128xf32>
    %30 = vector.extract_strided_slice %15 {offsets = [0, 384], sizes = [2, 128], strides = [1, 1]} : vector<2x512xf32> to vector<2x128xf32>
    %31 = arith.negf %30 : vector<2x128xf32>
    %32 = math.exp %31 : vector<2x128xf32>
    %cst_16 = arith.constant 1.000000e+00 : f32
    %33 = vector.broadcast %cst_16 : f32 to vector<2x128xf32>
    %34 = arith.addf %33, %32 : vector<2x128xf32>
    %35 = arith.divf %33, %34 : vector<2x128xf32>
    %36 = arith.mulf %27, %12 : vector<2x128xf32>
    %37 = arith.mulf %21, %29 : vector<2x128xf32>
    %38 = arith.addf %36, %37 : vector<2x128xf32>
    %39 = math.tanh %38 : vector<2x128xf32>
    %40 = arith.mulf %35, %39 : vector<2x128xf32>
    %41 = vector.extract_strided_slice %9 {offsets = [2, 0], sizes = [2, 512], strides = [1, 1]} : vector<16x512xf32> to vector<2x512xf32>
    %cst_17 = arith.constant dense<0.000000e+00> : vector<2x512xf32>
    %42 = tpu.matmul %40, %10, %cst_17 {dimension_numbers = #tpu.dot_dimension_numbers<[1], [0], [0], [1], [0, 0, 1, 1], [], []>} : vector<2x128xf32>, vector<128x512xf32>, vector<2x512xf32> -> vector<2x512xf32>
    %43 = arith.addf %41, %42 : vector<2x512xf32>
    %44 = vector.extract_strided_slice %43 {offsets = [0, 0], sizes = [2, 128], strides = [1, 1]} : vector<2x512xf32> to vector<2x128xf32>
    %45 = arith.negf %44 : vector<2x128xf32>
    %46 = math.exp %45 : vector<2x128xf32>
    %cst_18 = arith.constant 1.000000e+00 : f32
    %47 = vector.broadcast %cst_18 : f32 to vector<2x128xf32>
    %48 = arith.addf %47, %46 : vector<2x128xf32>
    %49 = arith.divf %47, %48 : vector<2x128xf32>
    %50 = vector.extract_strided_slice %43 {offsets = [0, 128], sizes = [2, 128], strides = [1, 1]} : vector<2x512xf32> to vector<2x128xf32>
    %51 = arith.negf %50 : vector<2x128xf32>
    %52 = math.exp %51 : vector<2x128xf32>
    %cst_19 = arith.constant 1.000000e+00 : f32
    %53 = vector.broadcast %cst_19 : f32 to vector<2x128xf32>
    %54 = arith.addf %53, %52 : vector<2x128xf32>
    %55 = arith.divf %53, %54 : vector<2x128xf32>
    %56 = vector.extract_strided_slice %43 {offsets = [0, 256], sizes = [2, 128], strides = [1, 1]} : vector<2x512xf32> to vector<2x128xf32>
    %57 = math.tanh %56 : vector<2x128xf32>
    %58 = vector.extract_strided_slice %43 {offsets = [0, 384], sizes = [2, 128], strides = [1, 1]} : vector<2x512xf32> to vector<2x128xf32>
    %59 = arith.negf %58 : vector<2x128xf32>
    %60 = math.exp %59 : vector<2x128xf32>
    %cst_20 = arith.constant 1.000000e+00 : f32
    %61 = vector.broadcast %cst_20 : f32 to vector<2x128xf32>
    %62 = arith.addf %61, %60 : vector<2x128xf32>
    %63 = arith.divf %61, %62 : vector<2x128xf32>
    %64 = arith.mulf %55, %38 : vector<2x128xf32>
    %65 = arith.mulf %49, %57 : vector<2x128xf32>
    %66 = arith.addf %64, %65 : vector<2x128xf32>
    %67 = math.tanh %66 : vector<2x128xf32>
    %68 = arith.mulf %63, %67 : vector<2x128xf32>
    %69 = vector.extract_strided_slice %9 {offsets = [4, 0], sizes = [2, 512], strides = [1, 1]} : vector<16x512xf32> to vector<2x512xf32>
    %cst_21 = arith.constant dense<0.000000e+00> : vector<2x512xf32>
    %70 = tpu.matmul %68, %10, %cst_21 {dimension_numbers = #tpu.dot_dimension_numbers<[1], [0], [0], [1], [0, 0, 1, 1], [], []>} : vector<2x128xf32>, vector<128x512xf32>, vector<2x512xf32> -> vector<2x512xf32>
    %71 = arith.addf %69, %70 : vector<2x512xf32>
    %72 = vector.extract_strided_slice %71 {offsets = [0, 0], sizes = [2, 128], strides = [1, 1]} : vector<2x512xf32> to vector<2x128xf32>
    %73 = arith.negf %72 : vector<2x128xf32>
    %74 = math.exp %73 : vector<2x128xf32>
    %cst_22 = arith.constant 1.000000e+00 : f32
    %75 = vector.broadcast %cst_22 : f32 to vector<2x128xf32>
    %76 = arith.addf %75, %74 : vector<2x128xf32>
    %77 = arith.divf %75, %76 : vector<2x128xf32>
    %78 = vector.extract_strided_slice %71 {offsets = [0, 128], sizes = [2, 128], strides = [1, 1]} : vector<2x512xf32> to vector<2x128xf32>
    %79 = arith.negf %78 : vector<2x128xf32>
    %80 = math.exp %79 : vector<2x128xf32>
    %cst_23 = arith.constant 1.000000e+00 : f32
    %81 = vector.broadcast %cst_23 : f32 to vector<2x128xf32>
    %82 = arith.addf %81, %80 : vector<2x128xf32>
    %83 = arith.divf %81, %82 : vector<2x128xf32>
    %84 = vector.extract_strided_slice %71 {offsets = [0, 256], sizes = [2, 128], strides = [1, 1]} : vector<2x512xf32> to vector<2x128xf32>
    %85 = math.tanh %84 : vector<2x128xf32>
    %86 = vector.extract_strided_slice %71 {offsets = [0, 384], sizes = [2, 128], strides = [1, 1]} : vector<2x512xf32> to vector<2x128xf32>
    %87 = arith.negf %86 : vector<2x128xf32>
    %88 = math.exp %87 : vector<2x128xf32>
    %cst_24 = arith.constant 1.000000e+00 : f32
    %89 = vector.broadcast %cst_24 : f32 to vector<2x128xf32>
    %90 = arith.addf %89, %88 : vector<2x128xf32>
    %91 = arith.divf %89, %90 : vector<2x128xf32>
    %92 = arith.mulf %83, %66 : vector<2x128xf32>
    %93 = arith.mulf %77, %85 : vector<2x128xf32>
    %94 = arith.addf %92, %93 : vector<2x128xf32>
    %95 = math.tanh %94 : vector<2x128xf32>
    %96 = arith.mulf %91, %95 : vector<2x128xf32>
    %97 = vector.extract_strided_slice %9 {offsets = [6, 0], sizes = [2, 512], strides = [1, 1]} : vector<16x512xf32> to vector<2x512xf32>
    %cst_25 = arith.constant dense<0.000000e+00> : vector<2x512xf32>
    %98 = tpu.matmul %96, %10, %cst_25 {dimension_numbers = #tpu.dot_dimension_numbers<[1], [0], [0], [1], [0, 0, 1, 1], [], []>} : vector<2x128xf32>, vector<128x512xf32>, vector<2x512xf32> -> vector<2x512xf32>
    %99 = arith.addf %97, %98 : vector<2x512xf32>
    %100 = vector.extract_strided_slice %99 {offsets = [0, 0], sizes = [2, 128], strides = [1, 1]} : vector<2x512xf32> to vector<2x128xf32>
    %101 = arith.negf %100 : vector<2x128xf32>
    %102 = math.exp %101 : vector<2x128xf32>
    %cst_26 = arith.constant 1.000000e+00 : f32
    %103 = vector.broadcast %cst_26 : f32 to vector<2x128xf32>
    %104 = arith.addf %103, %102 : vector<2x128xf32>
    %105 = arith.divf %103, %104 : vector<2x128xf32>
    %106 = vector.extract_strided_slice %99 {offsets = [0, 128], sizes = [2, 128], strides = [1, 1]} : vector<2x512xf32> to vector<2x128xf32>
    %107 = arith.negf %106 : vector<2x128xf32>
    %108 = math.exp %107 : vector<2x128xf32>
    %cst_27 = arith.constant 1.000000e+00 : f32
    %109 = vector.broadcast %cst_27 : f32 to vector<2x128xf32>
    %110 = arith.addf %109, %108 : vector<2x128xf32>
    %111 = arith.divf %109, %110 : vector<2x128xf32>
    %112 = vector.extract_strided_slice %99 {offsets = [0, 256], sizes = [2, 128], strides = [1, 1]} : vector<2x512xf32> to vector<2x128xf32>
    %113 = math.tanh %112 : vector<2x128xf32>
    %114 = vector.extract_strided_slice %99 {offsets = [0, 384], sizes = [2, 128], strides = [1, 1]} : vector<2x512xf32> to vector<2x128xf32>
    %115 = arith.negf %114 : vector<2x128xf32>
    %116 = math.exp %115 : vector<2x128xf32>
    %cst_28 = arith.constant 1.000000e+00 : f32
    %117 = vector.broadcast %cst_28 : f32 to vector<2x128xf32>
    %118 = arith.addf %117, %116 : vector<2x128xf32>
    %119 = arith.divf %117, %118 : vector<2x128xf32>
    %120 = arith.mulf %111, %94 : vector<2x128xf32>
    %121 = arith.mulf %105, %113 : vector<2x128xf32>
    %122 = arith.addf %120, %121 : vector<2x128xf32>
    %123 = math.tanh %122 : vector<2x128xf32>
    %124 = arith.mulf %119, %123 : vector<2x128xf32>
    %125 = vector.extract_strided_slice %9 {offsets = [8, 0], sizes = [2, 512], strides = [1, 1]} : vector<16x512xf32> to vector<2x512xf32>
    %cst_29 = arith.constant dense<0.000000e+00> : vector<2x512xf32>
    %126 = tpu.matmul %124, %10, %cst_29 {dimension_numbers = #tpu.dot_dimension_numbers<[1], [0], [0], [1], [0, 0, 1, 1], [], []>} : vector<2x128xf32>, vector<128x512xf32>, vector<2x512xf32> -> vector<2x512xf32>
    %127 = arith.addf %125, %126 : vector<2x512xf32>
    %128 = vector.extract_strided_slice %127 {offsets = [0, 0], sizes = [2, 128], strides = [1, 1]} : vector<2x512xf32> to vector<2x128xf32>
    %129 = arith.negf %128 : vector<2x128xf32>
    %130 = math.exp %129 : vector<2x128xf32>
    %cst_30 = arith.constant 1.000000e+00 : f32
    %131 = vector.broadcast %cst_30 : f32 to vector<2x128xf32>
    %132 = arith.addf %131, %130 : vector<2x128xf32>
    %133 = arith.divf %131, %132 : vector<2x128xf32>
    %134 = vector.extract_strided_slice %127 {offsets = [0, 128], sizes = [2, 128], strides = [1, 1]} : vector<2x512xf32> to vector<2x128xf32>
    %135 = arith.negf %134 : vector<2x128xf32>
    %136 = math.exp %135 : vector<2x128xf32>
    %cst_31 = arith.constant 1.000000e+00 : f32
    %137 = vector.broadcast %cst_31 : f32 to vector<2x128xf32>
    %138 = arith.addf %137, %136 : vector<2x128xf32>
    %139 = arith.divf %137, %138 : vector<2x128xf32>
    %140 = vector.extract_strided_slice %127 {offsets = [0, 256], sizes = [2, 128], strides = [1, 1]} : vector<2x512xf32> to vector<2x128xf32>
    %141 = math.tanh %140 : vector<2x128xf32>
    %142 = vector.extract_strided_slice %127 {offsets = [0, 384], sizes = [2, 128], strides = [1, 1]} : vector<2x512xf32> to vector<2x128xf32>
    %143 = arith.negf %142 : vector<2x128xf32>
    %144 = math.exp %143 : vector<2x128xf32>
    %cst_32 = arith.constant 1.000000e+00 : f32
    %145 = vector.broadcast %cst_32 : f32 to vector<2x128xf32>
    %146 = arith.addf %145, %144 : vector<2x128xf32>
    %147 = arith.divf %145, %146 : vector<2x128xf32>
    %148 = arith.mulf %139, %122 : vector<2x128xf32>
    %149 = arith.mulf %133, %141 : vector<2x128xf32>
    %150 = arith.addf %148, %149 : vector<2x128xf32>
    %151 = math.tanh %150 : vector<2x128xf32>
    %152 = arith.mulf %147, %151 : vector<2x128xf32>
    %153 = vector.extract_strided_slice %9 {offsets = [10, 0], sizes = [2, 512], strides = [1, 1]} : vector<16x512xf32> to vector<2x512xf32>
    %cst_33 = arith.constant dense<0.000000e+00> : vector<2x512xf32>
    %154 = tpu.matmul %152, %10, %cst_33 {dimension_numbers = #tpu.dot_dimension_numbers<[1], [0], [0], [1], [0, 0, 1, 1], [], []>} : vector<2x128xf32>, vector<128x512xf32>, vector<2x512xf32> -> vector<2x512xf32>
    %155 = arith.addf %153, %154 : vector<2x512xf32>
    %156 = vector.extract_strided_slice %155 {offsets = [0, 0], sizes = [2, 128], strides = [1, 1]} : vector<2x512xf32> to vector<2x128xf32>
    %157 = arith.negf %156 : vector<2x128xf32>
    %158 = math.exp %157 : vector<2x128xf32>
    %cst_34 = arith.constant 1.000000e+00 : f32
    %159 = vector.broadcast %cst_34 : f32 to vector<2x128xf32>
    %160 = arith.addf %159, %158 : vector<2x128xf32>
    %161 = arith.divf %159, %160 : vector<2x128xf32>
    %162 = vector.extract_strided_slice %155 {offsets = [0, 128], sizes = [2, 128], strides = [1, 1]} : vector<2x512xf32> to vector<2x128xf32>
    %163 = arith.negf %162 : vector<2x128xf32>
    %164 = math.exp %163 : vector<2x128xf32>
    %cst_35 = arith.constant 1.000000e+00 : f32
    %165 = vector.broadcast %cst_35 : f32 to vector<2x128xf32>
    %166 = arith.addf %165, %164 : vector<2x128xf32>
    %167 = arith.divf %165, %166 : vector<2x128xf32>
    %168 = vector.extract_strided_slice %155 {offsets = [0, 256], sizes = [2, 128], strides = [1, 1]} : vector<2x512xf32> to vector<2x128xf32>
    %169 = math.tanh %168 : vector<2x128xf32>
    %170 = vector.extract_strided_slice %155 {offsets = [0, 384], sizes = [2, 128], strides = [1, 1]} : vector<2x512xf32> to vector<2x128xf32>
    %171 = arith.negf %170 : vector<2x128xf32>
    %172 = math.exp %171 : vector<2x128xf32>
    %cst_36 = arith.constant 1.000000e+00 : f32
    %173 = vector.broadcast %cst_36 : f32 to vector<2x128xf32>
    %174 = arith.addf %173, %172 : vector<2x128xf32>
    %175 = arith.divf %173, %174 : vector<2x128xf32>
    %176 = arith.mulf %167, %150 : vector<2x128xf32>
    %177 = arith.mulf %161, %169 : vector<2x128xf32>
    %178 = arith.addf %176, %177 : vector<2x128xf32>
    %179 = math.tanh %178 : vector<2x128xf32>
    %180 = arith.mulf %175, %179 : vector<2x128xf32>
    %181 = vector.extract_strided_slice %9 {offsets = [12, 0], sizes = [2, 512], strides = [1, 1]} : vector<16x512xf32> to vector<2x512xf32>
    %cst_37 = arith.constant dense<0.000000e+00> : vector<2x512xf32>
    %182 = tpu.matmul %180, %10, %cst_37 {dimension_numbers = #tpu.dot_dimension_numbers<[1], [0], [0], [1], [0, 0, 1, 1], [], []>} : vector<2x128xf32>, vector<128x512xf32>, vector<2x512xf32> -> vector<2x512xf32>
    %183 = arith.addf %181, %182 : vector<2x512xf32>
    %184 = vector.extract_strided_slice %183 {offsets = [0, 0], sizes = [2, 128], strides = [1, 1]} : vector<2x512xf32> to vector<2x128xf32>
    %185 = arith.negf %184 : vector<2x128xf32>
    %186 = math.exp %185 : vector<2x128xf32>
    %cst_38 = arith.constant 1.000000e+00 : f32
    %187 = vector.broadcast %cst_38 : f32 to vector<2x128xf32>
    %188 = arith.addf %187, %186 : vector<2x128xf32>
    %189 = arith.divf %187, %188 : vector<2x128xf32>
    %190 = vector.extract_strided_slice %183 {offsets = [0, 128], sizes = [2, 128], strides = [1, 1]} : vector<2x512xf32> to vector<2x128xf32>
    %191 = arith.negf %190 : vector<2x128xf32>
    %192 = math.exp %191 : vector<2x128xf32>
    %cst_39 = arith.constant 1.000000e+00 : f32
    %193 = vector.broadcast %cst_39 : f32 to vector<2x128xf32>
    %194 = arith.addf %193, %192 : vector<2x128xf32>
    %195 = arith.divf %193, %194 : vector<2x128xf32>
    %196 = vector.extract_strided_slice %183 {offsets = [0, 256], sizes = [2, 128], strides = [1, 1]} : vector<2x512xf32> to vector<2x128xf32>
    %197 = math.tanh %196 : vector<2x128xf32>
    %198 = vector.extract_strided_slice %183 {offsets = [0, 384], sizes = [2, 128], strides = [1, 1]} : vector<2x512xf32> to vector<2x128xf32>
    %199 = arith.negf %198 : vector<2x128xf32>
    %200 = math.exp %199 : vector<2x128xf32>
    %cst_40 = arith.constant 1.000000e+00 : f32
    %201 = vector.broadcast %cst_40 : f32 to vector<2x128xf32>
    %202 = arith.addf %201, %200 : vector<2x128xf32>
    %203 = arith.divf %201, %202 : vector<2x128xf32>
    %204 = arith.mulf %195, %178 : vector<2x128xf32>
    %205 = arith.mulf %189, %197 : vector<2x128xf32>
    %206 = arith.addf %204, %205 : vector<2x128xf32>
    %207 = math.tanh %206 : vector<2x128xf32>
    %208 = arith.mulf %203, %207 : vector<2x128xf32>
    %209 = vector.extract_strided_slice %9 {offsets = [14, 0], sizes = [2, 512], strides = [1, 1]} : vector<16x512xf32> to vector<2x512xf32>
    %cst_41 = arith.constant dense<0.000000e+00> : vector<2x512xf32>
    %210 = tpu.matmul %208, %10, %cst_41 {dimension_numbers = #tpu.dot_dimension_numbers<[1], [0], [0], [1], [0, 0, 1, 1], [], []>} : vector<2x128xf32>, vector<128x512xf32>, vector<2x512xf32> -> vector<2x512xf32>
    %211 = arith.addf %209, %210 : vector<2x512xf32>
    %212 = vector.extract_strided_slice %211 {offsets = [0, 0], sizes = [2, 128], strides = [1, 1]} : vector<2x512xf32> to vector<2x128xf32>
    %213 = arith.negf %212 : vector<2x128xf32>
    %214 = math.exp %213 : vector<2x128xf32>
    %cst_42 = arith.constant 1.000000e+00 : f32
    %215 = vector.broadcast %cst_42 : f32 to vector<2x128xf32>
    %216 = arith.addf %215, %214 : vector<2x128xf32>
    %217 = arith.divf %215, %216 : vector<2x128xf32>
    %218 = vector.extract_strided_slice %211 {offsets = [0, 128], sizes = [2, 128], strides = [1, 1]} : vector<2x512xf32> to vector<2x128xf32>
    %219 = arith.negf %218 : vector<2x128xf32>
    %220 = math.exp %219 : vector<2x128xf32>
    %cst_43 = arith.constant 1.000000e+00 : f32
    %221 = vector.broadcast %cst_43 : f32 to vector<2x128xf32>
    %222 = arith.addf %221, %220 : vector<2x128xf32>
    %223 = arith.divf %221, %222 : vector<2x128xf32>
    %224 = vector.extract_strided_slice %211 {offsets = [0, 256], sizes = [2, 128], strides = [1, 1]} : vector<2x512xf32> to vector<2x128xf32>
    %225 = math.tanh %224 : vector<2x128xf32>
    %226 = vector.extract_strided_slice %211 {offsets = [0, 384], sizes = [2, 128], strides = [1, 1]} : vector<2x512xf32> to vector<2x128xf32>
    %227 = arith.negf %226 : vector<2x128xf32>
    %228 = math.exp %227 : vector<2x128xf32>
    %cst_44 = arith.constant 1.000000e+00 : f32
    %229 = vector.broadcast %cst_44 : f32 to vector<2x128xf32>
    %230 = arith.addf %229, %228 : vector<2x128xf32>
    %231 = arith.divf %229, %230 : vector<2x128xf32>
    %232 = arith.mulf %223, %206 : vector<2x128xf32>
    %233 = arith.mulf %217, %225 : vector<2x128xf32>
    %234 = arith.addf %232, %233 : vector<2x128xf32>
    %235 = math.tanh %234 : vector<2x128xf32>
    %236 = arith.mulf %231, %235 : vector<2x128xf32>
    %c0_45 = arith.constant 0 : index
    %c0_46 = arith.constant 0 : index
    %237 = vector.load %arg9[%c0_45, %c0_46] : memref<2x128xf32, #tpu.memory_space<vmem>>, vector<2x128xf32>
    tpu.vector_store %arg9[%c0_45, %c0_46], %236 {strides = array<i32>} : memref<2x128xf32, #tpu.memory_space<vmem>>, vector<2x128xf32>,
    %c0_47 = arith.constant 0 : index
    %c0_48 = arith.constant 0 : index
    %238 = vector.load %arg10[%c0_47, %c0_48] : memref<2x128xf32, #tpu.memory_space<vmem>>, vector<2x128xf32>
    tpu.vector_store %arg10[%c0_47, %c0_48], %234 {strides = array<i32>} : memref<2x128xf32, #tpu.memory_space<vmem>>, vector<2x128xf32>,
    %239 = tpu.concatenate %40, %68, %96, %124, %152, %180, %208, %236 in 1 : vector<2x128xf32>, vector<2x128xf32>, vector<2x128xf32>, vector<2x128xf32>, vector<2x128xf32>, vector<2x128xf32>, vector<2x128xf32>, vector<2x128xf32> -> vector<2x1024xf32>
    %240 = arith.negf %239 : vector<2x1024xf32>
    %241 = math.exp %240 : vector<2x1024xf32>
    %cst_49 = arith.constant 1.000000e+00 : f32
    %242 = vector.broadcast %cst_49 : f32 to vector<2x1024xf32>
    %243 = arith.addf %242, %241 : vector<2x1024xf32>
    %244 = arith.divf %242, %243 : vector<2x1024xf32>
    %245 = math.roundeven %244 : vector<2x1024xf32>
    %246 = arith.truncf %245 : vector<2x1024xf32> to vector<2x1024xbf16>
    %c0_50 = arith.constant 0 : index
    %c0_51 = arith.constant 0 : index
    %247 = vector.load %arg8[%c0_50, %c0_51] : memref<2x1024xbf16, #tpu.memory_space<vmem>>, vector<2x1024xbf16>
    tpu.vector_store %arg8[%c0_50, %c0_51], %246 {strides = array<i32>} : memref<2x1024xbf16, #tpu.memory_space<vmem>>, vector<2x1024xbf16>,
    return
  }
  func.func @transform_0(%arg0: i32, %arg1: i32) -> (i32, i32, i32) {
    %c0_i32 = arith.constant 0 : i32
    %c0_i32_0 = arith.constant 0 : i32
    return %arg1, %arg0, %c0_i32 : i32, i32, i32
  }
  func.func @transform_1(%arg0: i32, %arg1: i32) -> (i32, i32) {
    %c0_i32 = arith.constant 0 : i32
    %c0_i32_0 = arith.constant 0 : i32
    return %arg0, %c0_i32 : i32, i32
  }
  func.func @transform_2(%arg0: i32, %arg1: i32) -> (i32, i32) {
    %c0_i32 = arith.constant 0 : i32
    %c0_i32_0 = arith.constant 0 : i32
    return %arg0, %c0_i32 : i32, i32
  }
  func.func @transform_3(%arg0: i32, %arg1: i32) -> (i32, i32) {
    %c0_i32 = arith.constant 0 : i32
    %c0_i32_0 = arith.constant 0 : i32
    %c0_i32_1 = arith.constant 0 : i32
    return %c0_i32, %c0_i32_0 : i32, i32
  }
  func.func @transform_4(%arg0: i32, %arg1: i32) -> (i32, i32) {
    %c0_i32 = arith.constant 0 : i32
    %c0_i32_0 = arith.constant 0 : i32
    %c0_i32_1 = arith.constant 0 : i32
    return %c0_i32, %c0_i32_0 : i32, i32
  }
  func.func @transform_5(%arg0: i32, %arg1: i32) -> (i32, i32) {
    %c0_i32 = arith.constant 0 : i32
    %c0_i32_0 = arith.constant 0 : i32
    %c0_i32_1 = arith.constant 0 : i32
    return %c0_i32, %c0_i32_0 : i32, i32
  }
  func.func @transform_6(%arg0: i32, %arg1: i32) -> (i32, i32) {
    %c0_i32 = arith.constant 0 : i32
    return %arg0, %arg1 : i32, i32
  }
  func.func @transform_7(%arg0: i32, %arg1: i32) -> (i32, i32) {
    %c0_i32 = arith.constant 0 : i32
    %c0_i32_0 = arith.constant 0 : i32
    return %arg0, %c0_i32 : i32, i32
  }
  func.func @transform_8(%arg0: i32, %arg1: i32) -> (i32, i32) {
    %c0_i32 = arith.constant 0 : i32
    %c0_i32_0 = arith.constant 0 : i32
    return %arg0, %c0_i32 : i32, i32
  }
}

</mosaic_0001>

<llo_original>
// kernel: tpu_custom_call.1
$region0: #{tpu_custom_call.1}
  #allocation0 [shape = 'u32[]', space=smem, size = 0x4, offset = 0x4, fixed_abs, tag = 'smem constant byte address 0x4 - core index']
  #allocation1 [shape = 'u32[144,128]{1,0:T(1,128)}', space=vmem, size = 0x12000, scoped, tag = 'internal scratch']
  %s0 = inlined_call_operand.hbm [shape: f32[16,2,16], index: 0, kind: input, shape index: {}]
  %s1 = inlined_call_operand.hbm [shape: f32[2,128], index: 1, kind: input, shape index: {}]
  %s2 = inlined_call_operand.vmem [shape: f32[2,128], index: 2, kind: input, shape index: {}]
  %s3 = inlined_call_operand.hbm [shape: f32[16,512], index: 3, kind: input, shape index: {}]
  %s4 = inlined_call_operand.hbm [shape: f32[128,512], index: 4, kind: input, shape index: {}]
  %s5 = inlined_call_operand.vmem [shape: f32[1,512], index: 5, kind: input, shape index: {}]
  %s6 = inlined_call_operand.hbm [shape: bf16[2,2048], index: 6, kind: output, shape index: {0}]
  %s7 = inlined_call_operand.hbm [shape: f32[2,128], index: 7, kind: output, shape index: {1}]
  %s8 = inlined_call_operand.hbm [shape: f32[2,128], index: 8, kind: output, shape index: {2}]
  %9 = xla_tuple %s6, %s7, %s8
  %s10 = sld [smem:[#allocation0]]
  $region93: #{tpu_custom_call.1} parent=0
    _
  %s12 = ssub.s32 1, %s10
  %s13 = scalar_select 0, %s12, %s10
  $region1: #{tpu_custom_call.1} parent=0
    #allocation2 [shape = 'u8[16384]{0}', space=vmem, size = 0x4000, scoped, tag = 'input window, operand 0']
    #allocation3 [shape = 's32[2]{0}', space=sflag, size = 0x8, scoped, tag = 'scoped memory for tpu_custom_call.1']
    #allocation4 [shape = 's32[2]{0}', space=sflag, size = 0x8, scoped, tag = 'scoped memory for tpu_custom_call.1']
    #allocation5 [shape = 'u8[1024]{0}', space=vmem, size = 0x400, scoped, tag = 'input window, operand 1, single buffered']
    #allocation6 [shape = 's32[1]{0}', space=sflag, size = 0x4, scoped, tag = 'scoped memory for tpu_custom_call.1']
    #allocation7 [shape = 'u8[32768]{0}', space=vmem, size = 0x8000, scoped, tag = 'input window, operand 3, single buffered']
    #allocation8 [shape = 'u8[262144]{0}', space=vmem, size = 0x40000, scoped, tag = 'input window, operand 4, single buffered']
    #allocation9 [shape = 's32[1]{0}', space=sflag, size = 0x4, scoped, tag = 'scoped memory for tpu_custom_call.1']
    #allocation10 [shape = 'u8[8192]{0}', space=vmem, size = 0x2000, scoped, tag = 'output window, operand 0']
    #allocation11 [shape = 'u8[1024]{0}', space=vmem, size = 0x400, scoped, tag = 'output window, operand 1, single buffered']
    #allocation12 [shape = 's32[1]{0}', space=sflag, size = 0x4, scoped, tag = 'scoped memory for tpu_custom_call.1']
    #allocation13 [shape = 'u8[1024]{0}', space=vmem, size = 0x400, scoped, tag = 'output window, operand 2, single buffered']
    %14 = vsyncpa [#allocation3], 0
    %s15 = scalar_lea.sflag [#allocation3], 1
    %16 = vsyncpa %s15, 0
    %17 = vsyncpa [#allocation6], 0
    %18 = vsyncpa [#allocation9], 0
    %19 = vsyncpa [#allocation4], 0
    %s20 = scalar_lea.sflag [#allocation4], 1
    %21 = vsyncpa %s20, 0
    %22 = vsyncpa [#allocation12], 0
    loop: start=0, step=1, limit=4
    $region2: #{tpu_custom_call.1} parent=1 // loop_pre_header
      _
    $region3: #{tpu_custom_call.1} parent=1 // loop_header
      %s24 = sphi 0, %s28
      %p25 = scmp.ge.s32.totalorder %s24, 4
      %s31 = sphi 0, %s43
      %s32 = sphi 0, %s39
      %s33 = sphi 0, %s31
      %s34 = sphi 0, %s32
      %s35 = sphi 0, %s33
      %s36 = sphi 0, %s34
      %s48 = sphi 0, %s50
      %s51 = sphi 0, %s48
      %s52 = sphi 0, %s51
      %s68 = sphi 0, %s52
      %s74 = sphi 0, %s76
      %s77 = sphi 0, %s74
      %s78 = sphi 0, %s77
      %s94 = sphi 0, %s78
      %s100 = sphi 0, %s102
      %s103 = sphi 0, %s100
      %s104 = sphi 0, %s103
      %s120 = sphi 0, %s104
      %s124 = sphi 0, %s124
      %s126 = sphi 0, %s124
      %s127 = sphi 0, %s126
      %s141 = sphi 0, %s127
      %s145 = sphi 0, %s145
      %s147 = sphi 0, %s145
      %s148 = sphi 0, %s147
      %s162 = sphi 0, %s148
      %s166 = sphi 0, %s166
      %s168 = sphi 0, %s166
      %s169 = sphi 0, %s168
      %s183 = sphi 0, %s169
      %s191 = sphi 0, %s193
      %s194 = sphi 0, %s191
      %s195 = sphi 0, %s194
      %s211 = sphi 0, %s195
      %s217 = sphi 0, %s219
      %s220 = sphi 0, %s217
      %s221 = sphi 0, %s220
      %s237 = sphi 0, %s221
      %s243 = sphi 0, %s245
      %s246 = sphi 0, %s243
      %s247 = sphi 0, %s246
      %s263 = sphi 0, %s247
    $region4: #{tpu_custom_call.1} parent=1 // loop_header_branch
      %27 = sbr.rel (%p25) target = $region8
    $region5: #{tpu_custom_call.1} parent=1 // loop_body
      %s29 = ssub.s32 %s24, 1
      %s30 = ssub.s32 %s24, 2
      %s37 = sadd.s32 1, %s32
      %p38 = scmp.ge.s32.totalorder %s37, 2
      %s39 = scalar_select %p38, 0, %s37
      %s40 = sadd.s32 1, %s31
      %s41 = scalar_select %p38, %s40, %s31
      %p42 = scmp.ge.s32.totalorder %s41, 1
      %s43 = scalar_select %p42, 0, %s41
      %s44 = ssub.s32 %s32, %s39
      %s45 = ssub.s32 %s31, %s43
      %s46 = sor.u32 %s44, %s45
      %p47 = scmp.eq.s32.totalorder %s46, 0
      %s49 = sadd.s32 %s48, 1
      %s50 = scalar_select %p47, %s48, %s49
      %p53 = pneg %p47
      %p54 = scmp.eq.s32.totalorder %s24, 1
      %p55 = por %p53, %p54
      %p56 = scmp.ne.s32.totalorder %s48, %s51
      %p57 = scmp.eq.s32.totalorder %s24, 0
      %p58 = por %p56, %p57
      %p59 = scmp.ne.s32.totalorder %s48, %s51
      %p60 = scmp.eq.s32.totalorder %s29, 1
      %p61 = por %p59, %p60
      %p62 = scmp.ne.s32.totalorder %s51, %s52
      %p63 = scmp.eq.s32.totalorder %s29, 0
      %p64 = por %p62, %p63
      %p65 = scmp.ne.s32.totalorder %s51, %s52
      %p66 = scmp.eq.s32.totalorder %s30, 1
      %p67 = por %p65, %p66
      %p69 = scmp.ne.s32.totalorder %s52, %s68
      %p70 = scmp.eq.s32.totalorder %s30, 0
      %p71 = por %p69, %p70
      %s72 = ssub.s32 %s31, %s43
      %p73 = scmp.eq.s32.totalorder %s72, 0
      %s75 = sadd.s32 %s74, 1
      %s76 = scalar_select %p73, %s74, %s75
      %p79 = pneg %p73
      %p80 = scmp.eq.s32.totalorder %s24, 1
      %p81 = por %p79, %p80
      %p82 = scmp.ne.s32.totalorder %s74, %s77
      %p83 = scmp.eq.s32.totalorder %s24, 0
      %p84 = por %p82, %p83
      %p85 = scmp.ne.s32.totalorder %s74, %s77
      %p86 = scmp.eq.s32.totalorder %s29, 1
      %p87 = por %p85, %p86
      %p88 = scmp.ne.s32.totalorder %s77, %s78
      %p89 = scmp.eq.s32.totalorder %s29, 0
      %p90 = por %p88, %p89
      %p91 = scmp.ne.s32.totalorder %s77, %s78
      %p92 = scmp.eq.s32.totalorder %s30, 1
      %p93 = por %p91, %p92
      %p95 = scmp.ne.s32.totalorder %s78, %s94
      %p96 = scmp.eq.s32.totalorder %s30, 0
      %p97 = por %p95, %p96
      %s98 = ssub.s32 %s31, %s43
      %p99 = scmp.eq.s32.totalorder %s98, 0
      %s101 = sadd.s32 %s100, 1
      %s102 = scalar_select %p99, %s100, %s101
      %p105 = pneg %p99
      %p106 = scmp.eq.s32.totalorder %s24, 1
      %p107 = por %p105, %p106
      %p108 = scmp.ne.s32.totalorder %s100, %s103
      %p109 = scmp.eq.s32.totalorder %s24, 0
      %p110 = por %p108, %p109
      %p111 = scmp.ne.s32.totalorder %s100, %s103
      %p112 = scmp.eq.s32.totalorder %s29, 1
      %p113 = por %p111, %p112
      %p114 = scmp.ne.s32.totalorder %s103, %s104
      %p115 = scmp.eq.s32.totalorder %s29, 0
      %p116 = por %p114, %p115
      %p117 = scmp.ne.s32.totalorder %s103, %s104
      %p118 = scmp.eq.s32.totalorder %s30, 1
      %p119 = por %p117, %p118
      %p121 = scmp.ne.s32.totalorder %s104, %s120
      %p122 = scmp.eq.s32.totalorder %s30, 0
      %p123 = por %p121, %p122
      %s125 = sadd.s32 %s124, 1
      %p128 = scmp.eq.s32.totalorder %s24, 1
      %p129 = scmp.ne.s32.totalorder %s124, %s126
      %p130 = scmp.eq.s32.totalorder %s24, 0
      %p131 = por %p129, %p130
      %p132 = scmp.ne.s32.totalorder %s124, %s126
      %p133 = scmp.eq.s32.totalorder %s29, 1
      %p134 = por %p132, %p133
      %p135 = scmp.ne.s32.totalorder %s126, %s127
      %p136 = scmp.eq.s32.totalorder %s29, 0
      %p137 = por %p135, %p136
      %p138 = scmp.ne.s32.totalorder %s126, %s127
      %p139 = scmp.eq.s32.totalorder %s30, 1
      %p140 = por %p138, %p139
      %p142 = scmp.ne.s32.totalorder %s127, %s141
      %p143 = scmp.eq.s32.totalorder %s30, 0
      %p144 = por %p142, %p143
      %s146 = sadd.s32 %s145, 1
      %p149 = scmp.eq.s32.totalorder %s24, 1
      %p150 = scmp.ne.s32.totalorder %s145, %s147
      %p151 = scmp.eq.s32.totalorder %s24, 0
      %p152 = por %p150, %p151
      %p153 = scmp.ne.s32.totalorder %s145, %s147
      %p154 = scmp.eq.s32.totalorder %s29, 1
      %p155 = por %p153, %p154
      %p156 = scmp.ne.s32.totalorder %s147, %s148
      %p157 = scmp.eq.s32.totalorder %s29, 0
      %p158 = por %p156, %p157
      %p159 = scmp.ne.s32.totalorder %s147, %s148
      %p160 = scmp.eq.s32.totalorder %s30, 1
      %p161 = por %p159, %p160
      %p163 = scmp.ne.s32.totalorder %s148, %s162
      %p164 = scmp.eq.s32.totalorder %s30, 0
      %p165 = por %p163, %p164
      %s167 = sadd.s32 %s166, 1
      %p170 = scmp.eq.s32.totalorder %s24, 1
      %p171 = scmp.ne.s32.totalorder %s166, %s168
      %p172 = scmp.eq.s32.totalorder %s24, 0
      %p173 = por %p171, %p172
      %p174 = scmp.ne.s32.totalorder %s166, %s168
      %p175 = scmp.eq.s32.totalorder %s29, 1
      %p176 = por %p174, %p175
      %p177 = scmp.ne.s32.totalorder %s168, %s169
      %p178 = scmp.eq.s32.totalorder %s29, 0
      %p179 = por %p177, %p178
      %p180 = scmp.ne.s32.totalorder %s168, %s169
      %p181 = scmp.eq.s32.totalorder %s30, 1
      %p182 = por %p180, %p181
      %p184 = scmp.ne.s32.totalorder %s169, %s183
      %p185 = scmp.eq.s32.totalorder %s30, 0
      %p186 = por %p184, %p185
      %s187 = ssub.s32 %s31, %s43
      %s188 = ssub.s32 %s32, %s39
      %s189 = sor.u32 %s187, %s188
      %p190 = scmp.eq.s32.totalorder %s189, 0
      %s192 = sadd.s32 %s191, 1
      %s193 = scalar_select %p190, %s191, %s192
      %p196 = pneg %p190
      %p197 = scmp.eq.s32.totalorder %s24, 1
      %p198 = por %p196, %p197
      %p199 = scmp.ne.s32.totalorder %s191, %s194
      %p200 = scmp.eq.s32.totalorder %s24, 0
      %p201 = por %p199, %p200
      %p202 = scmp.ne.s32.totalorder %s191, %s194
      %p203 = scmp.eq.s32.totalorder %s29, 1
      %p204 = por %p202, %p203
      %p205 = scmp.ne.s32.totalorder %s194, %s195
      %p206 = scmp.eq.s32.totalorder %s29, 0
      %p207 = por %p205, %p206
      %p208 = scmp.ne.s32.totalorder %s194, %s195
      %p209 = scmp.eq.s32.totalorder %s30, 1
      %p210 = por %p208, %p209
      %p212 = scmp.ne.s32.totalorder %s195, %s211
      %p213 = scmp.eq.s32.totalorder %s30, 0
      %p214 = por %p212, %p213
      %s215 = ssub.s32 %s31, %s43
      %p216 = scmp.eq.s32.totalorder %s215, 0
      %s218 = sadd.s32 %s217, 1
      %s219 = scalar_select %p216, %s217, %s218
      %p222 = pneg %p216
      %p223 = scmp.eq.s32.totalorder %s24, 1
      %p224 = por %p222, %p223
      %p225 = scmp.ne.s32.totalorder %s217, %s220
      %p226 = scmp.eq.s32.totalorder %s24, 0
      %p227 = por %p225, %p226
      %p228 = scmp.ne.s32.totalorder %s217, %s220
      %p229 = scmp.eq.s32.totalorder %s29, 1
      %p230 = por %p228, %p229
      %p231 = scmp.ne.s32.totalorder %s220, %s221
      %p232 = scmp.eq.s32.totalorder %s29, 0
      %p233 = por %p231, %p232
      %p234 = scmp.ne.s32.totalorder %s220, %s221
      %p235 = scmp.eq.s32.totalorder %s30, 1
      %p236 = por %p234, %p235
      %p238 = scmp.ne.s32.totalorder %s221, %s237
      %p239 = scmp.eq.s32.totalorder %s30, 0
      %p240 = por %p238, %p239
      %s241 = ssub.s32 %s31, %s43
      %p242 = scmp.eq.s32.totalorder %s241, 0
      %s244 = sadd.s32 %s243, 1
      %s245 = scalar_select %p242, %s243, %s244
      %p248 = pneg %p242
      %p249 = scmp.eq.s32.totalorder %s24, 1
      %p250 = por %p248, %p249
      %p251 = scmp.ne.s32.totalorder %s243, %s246
      %p252 = scmp.eq.s32.totalorder %s24, 0
      %p253 = por %p251, %p252
      %p254 = scmp.ne.s32.totalorder %s243, %s246
      %p255 = scmp.eq.s32.totalorder %s29, 1
      %p256 = por %p254, %p255
      %p257 = scmp.ne.s32.totalorder %s246, %s247
      %p258 = scmp.eq.s32.totalorder %s29, 0
      %p259 = por %p257, %p258
      %p260 = scmp.ne.s32.totalorder %s246, %s247
      %p261 = scmp.eq.s32.totalorder %s30, 1
      %p262 = por %p260, %p261
      %p264 = scmp.ne.s32.totalorder %s247, %s263
      %p265 = scmp.eq.s32.totalorder %s30, 0
      %p266 = por %p264, %p265
      %p267 = scmp.le.s32.totalorder 1, %s24
      %p268 = scmp.lt.s32.totalorder %s24, 3
      %p269 = pnand %p267, %p268
      %p270 = pneg %p269
      // Predicated region
      $region9: #{tpu_custom_call.1} parent=5 // pred_check
        _
      $region10: #{tpu_custom_call.1} parent=5 // pred_check_branch
        %272 = sbr.rel (%p269) target = $region12
      $region11: #{tpu_custom_call.1} parent=5 // pred_region
        %s273 = ssub.s32 %s24, 1
        // Predicated region
        $region13: #{tpu_custom_call.1} parent=11 // pred_check
          %p274 = pneg %p90
        $region14: #{tpu_custom_call.1} parent=11 // pred_check_branch
          %276 = sbr.rel (%p274) target = $region16
        $region15: #{tpu_custom_call.1} parent=11 // pred_region
          %s278 = ssub.s32 32, 32
          %279 = vsyncadd [#allocation6], %s278
          %s280 = smul.addr %s33, 32
          %s281 = scalar_lea.hbm %s1, %s280
          %s283 = sshll.u32 [#allocation5], 4
          %s284 = int_to_ptr.vmem [resolvable:$true] %s283
          %286 = dma.hbm_to_vmem [thread:$0]  %s281, 32, %s284, [#allocation6]
        $region16: #{tpu_custom_call.1} parent=11 // pred_fallthru
          _
        // Predicated region
        $region17: #{tpu_custom_call.1} parent=11 // pred_check
          %p287 = pneg %p116
        $region18: #{tpu_custom_call.1} parent=11 // pred_check_branch
          %289 = sbr.rel (%p287) target = $region20
        $region19: #{tpu_custom_call.1} parent=11 // pred_region
          %p290 = scmp.lt.s32.totalorder %s33, 0
          %s291 = scalar_select %p290, %s33, 0
          %s292 = smul.addr %s291, 2
          %s293 = scalar_lea.vmem %s2, %s292
        $region20: #{tpu_custom_call.1} parent=11 // pred_fallthru
          _
        // Predicated region
        $region21: #{tpu_custom_call.1} parent=11 // pred_check
          %p294 = pneg %p137
        $region22: #{tpu_custom_call.1} parent=11 // pred_check_branch
          %296 = sbr.rel (%p294) target = $region24
        $region23: #{tpu_custom_call.1} parent=11 // pred_region
          %s298 = ssub.s32 1024, 1024
          %299 = vsyncadd [#allocation6], %s298
          %s300 = sshll.u32 [#allocation7], 4
          %s301 = int_to_ptr.vmem [resolvable:$true] %s300
          %306 = dma.hbm_to_vmem [thread:$0]  %s3, 1024, %s301, [#allocation6], 512, 512, 32
        $region24: #{tpu_custom_call.1} parent=11 // pred_fallthru
          _
        // Predicated region
        $region25: #{tpu_custom_call.1} parent=11 // pred_check
          %p307 = pneg %p158
        $region26: #{tpu_custom_call.1} parent=11 // pred_check_branch
          %309 = sbr.rel (%p307) target = $region28
        $region27: #{tpu_custom_call.1} parent=11 // pred_region
          %s311 = ssub.s32 8192, 8192
          %312 = vsyncadd [#allocation9], %s311
          %s313 = sshll.u32 [#allocation8], 4
          %s314 = int_to_ptr.vmem [resolvable:$true] %s313
          %319 = dma.hbm_to_vmem [thread:$0]  %s4, 8192, %s314, [#allocation9], 512, 512, 32
        $region28: #{tpu_custom_call.1} parent=11 // pred_fallthru
          _
        // Predicated region
        $region29: #{tpu_custom_call.1} parent=11 // pred_check
          %p320 = pneg %p179
        $region30: #{tpu_custom_call.1} parent=11 // pred_check_branch
          %322 = sbr.rel (%p320) target = $region32
        $region31: #{tpu_custom_call.1} parent=11 // pred_region
          _
        $region32: #{tpu_custom_call.1} parent=11 // pred_fallthru
          _
      $region12: #{tpu_custom_call.1} parent=5 // pred_fallthru
        _
      %p323 = scmp.lt.s32.totalorder %s24, 2
      // Predicated region
      $region33: #{tpu_custom_call.1} parent=5 // pred_check
        %p324 = pneg %p323
      $region34: #{tpu_custom_call.1} parent=5 // pred_check_branch
        %326 = sbr.rel (%p324) target = $region36
      $region35: #{tpu_custom_call.1} parent=5 // pred_region
        // Predicated region
        $region37: #{tpu_custom_call.1} parent=35 // pred_check
          %p327 = pneg %p58
        $region38: #{tpu_custom_call.1} parent=35 // pred_check_branch
          %329 = sbr.rel (%p327) target = $region40
        $region39: #{tpu_custom_call.1} parent=35 // pred_region
          %s330 = sand.u32 %s48, 1
          %s331 = scalar_lea.sflag [#allocation3], %s330
          %s332 = sand.u32 %s48, 1
          %s333 = smul.addr %s332, 16
          %s334 = scalar_lea.vmem [#allocation2], %s333
          %s335 = smul.u32 8, %s32
          %s337 = ssub.s32 256, 256
          %338 = vsyncadd %s331, %s337
          %s339 = sadd.s32 %s31, %s335
          %s340 = smul.addr %s339, 32
          %s341 = scalar_lea.hbm %s0, %s340
          %s342 = sshll.u32 %s334, 4
          %s343 = int_to_ptr.vmem [resolvable:$true] %s342
          %348 = dma.hbm_to_vmem [thread:$0]  %s341, 256, %s343, %s331, 32, 32, 2
        $region40: #{tpu_custom_call.1} parent=35 // pred_fallthru
          _
      $region36: #{tpu_custom_call.1} parent=5 // pred_fallthru
        _
      %p349 = scmp.le.s32.totalorder 1, %s24
      %p350 = scmp.lt.s32.totalorder %s24, 3
      %p351 = pnand %p349, %p350
      %p352 = pneg %p351
      // Predicated region
      $region41: #{tpu_custom_call.1} parent=5 // pred_check
        _
      $region42: #{tpu_custom_call.1} parent=5 // pred_check_branch
        %354 = sbr.rel (%p351) target = $region44
      $region43: #{tpu_custom_call.1} parent=5 // pred_region
        %s355 = ssub.s32 %s24, 1
        %s356 = sand.u32 %s51, 1
        %s357 = scalar_lea.sflag [#allocation3], %s356
        %s358 = sand.u32 %s51, 1
        %s359 = smul.addr %s358, 16
        %s360 = scalar_lea.vmem [#allocation2], %s359
        // Predicated region
        $region45: #{tpu_custom_call.1} parent=43 // pred_check
          %p361 = pneg %p64
        $region46: #{tpu_custom_call.1} parent=43 // pred_check_branch
          %363 = sbr.rel (%p361) target = $region48
        $region47: #{tpu_custom_call.1} parent=43 // pred_region
          %364 = dma.done %s357, 256
        $region48: #{tpu_custom_call.1} parent=43 // pred_fallthru
          _
        // Predicated region
        $region49: #{tpu_custom_call.1} parent=43 // pred_check
          %p365 = pneg %p90
        $region50: #{tpu_custom_call.1} parent=43 // pred_check_branch
          %367 = sbr.rel (%p365) target = $region52
        $region51: #{tpu_custom_call.1} parent=43 // pred_region
          %368 = dma.done [#allocation6], 32
        $region52: #{tpu_custom_call.1} parent=43 // pred_fallthru
          _
        // Predicated region
        $region53: #{tpu_custom_call.1} parent=43 // pred_check
          %p369 = pneg %p137
        $region54: #{tpu_custom_call.1} parent=43 // pred_check_branch
          %371 = sbr.rel (%p369) target = $region56
        $region55: #{tpu_custom_call.1} parent=43 // pred_region
          %372 = dma.done [#allocation6], 1024
        $region56: #{tpu_custom_call.1} parent=43 // pred_fallthru
          _
        // Predicated region
        $region57: #{tpu_custom_call.1} parent=43 // pred_check
          %p373 = pneg %p158
        $region58: #{tpu_custom_call.1} parent=43 // pred_check_branch
          %375 = sbr.rel (%p373) target = $region60
        $region59: #{tpu_custom_call.1} parent=43 // pred_region
          %376 = dma.done [#allocation9], 8192
        $region60: #{tpu_custom_call.1} parent=43 // pred_fallthru
          _
        %s377 = sand.u32 %s51, 1
        %s378 = scalar_lea.sflag [#allocation3], %s377
        %s379 = sand.u32 %s51, 1
        %s380 = smul.addr %s379, 16
        %s381 = scalar_lea.vmem [#allocation2], %s380
        %p382 = pneg %p64
        %p383 = pneg %p61
        %p384 = pneg %p90
        %p385 = pneg %p87
        %p386 = scmp.lt.s32.totalorder %s33, 0
        %s387 = scalar_select %p386, %s33, 0
        %s388 = smul.addr %s387, 2
        %s389 = scalar_lea.vmem %s2, %s388
        %p390 = pneg %p116
        %p391 = pneg %p113
        %p392 = pneg %p137
        %p393 = pneg %p134
        %p394 = pneg %p158
        %p395 = pneg %p155
        %p396 = pneg %p179
        %p397 = pneg %p176
        %p398 = pneg %p207
        %p399 = pneg %p204
        %s400 = sand.u32 %s194, 1
        %s401 = scalar_lea.sflag [#allocation4], %s400
        %s402 = sand.u32 %s194, 1
        %s403 = smul.addr %s402, 8
        %s404 = scalar_lea.vmem [#allocation10], %s403
        %p405 = pneg %p233
        %p406 = pneg %p230
        %p407 = pneg %p259
        %p408 = pneg %p256
        %s409 = smul.u32 8, %s34
        %p410 = scmp.lt.s32.totalorder %s33, 0
        %s411 = scalar_select %p410, %s33, 0
        %s412 = smul.addr %s411, 2
        %s413 = scalar_lea.vmem %s2, %s412
        %s414 = smul.u32 8, %s34
        %p415 = scmp.eq.s32.totalorder %s34, 0
        // Predicated region
        $region61: #{tpu_custom_call.1} parent=43 // pred_check
          %p416 = pneg %p415
        $region62: #{tpu_custom_call.1} parent=43 // pred_check_branch
          %418 = sbr.rel (%p416) target = $region64
        $region63: #{tpu_custom_call.1} parent=43 // pred_region
          %v419 = vld [vmem:[#allocation5] sm:$0x3]
          %420 = vst [vmem:[#allocation11] sm:$0x3] %v419
          %v421 = vld [vmem:[%s413] sm:$0x3]
          %422 = vst [vmem:[#allocation13] sm:$0x3] %v421
        $region64: #{tpu_custom_call.1} parent=43 // pred_fallthru
          _
        %v423 = vld [vmem:[%s360] sm:$0x3]
        %v424 = vld [vmem:[%s360 + $0x2] sm:$0x3]
        %v425 = vld [vmem:[%s360 + $0x4] sm:$0x3]
        %v426 = vld [vmem:[%s360 + $0x6] sm:$0x3]
        %v427 = vld [vmem:[%s360 + $0x8] sm:$0x3]
        %v428 = vld [vmem:[%s360 + $0xa] sm:$0x3]
        %v429 = vld [vmem:[%s360 + $0xc] sm:$0x3]
        %v430 = vld [vmem:[%s360 + $0xe] sm:$0x3]
        %v431 = vld [vmem:[#allocation7] sm:$0xff]
        %v432 = vld [vmem:[#allocation7 + $0x8] sm:$0xff]
        %v433 = vld [vmem:[#allocation7 + $0x10] sm:$0xff]
        %v434 = vld [vmem:[#allocation7 + $0x18] sm:$0xff]
        %v435 = vld [vmem:[#allocation7 + $0x20] sm:$0xff]
        %v436 = vld [vmem:[#allocation7 + $0x28] sm:$0xff]
        %v437 = vld [vmem:[#allocation7 + $0x30] sm:$0xff]
        %v438 = vld [vmem:[#allocation7 + $0x38] sm:$0xff]
        %v439 = vld [vmem:[%s5] sm:$0xf]
        %v441 = vlaneseq
        %v442 = vshrl.u32 %v441, 7
        %v443 = vsub.s32 0, %v442
        %v444 = vrot.slane %v439, %v443
        %v445 = vlaneseq
        %v446 = vshrl.u32 %v445, 7
        %v447 = vsub.s32 1, %v446
        %v448 = vrot.slane %v439, %v447
        %v449 = vlaneseq
        %v450 = vshrl.u32 %v449, 7
        %v451 = vsub.s32 2, %v450
        %v452 = vrot.slane %v439, %v451
        %v453 = vlaneseq
        %v454 = vshrl.u32 %v453, 7
        %v455 = vsub.s32 3, %v454
        %v456 = vrot.slane %v439, %v455
        %v469 = vcombine.low %v423, %v424
        %v470 = vcombine.low %v425, %v426
        %v472 = vunpack.c.l.s4 1983009808
        %v473 = vunpack.c.0.s8 %v472
        %v474 = vlaneseq
        %v475 = vshrl.u32 %v474, 7
        %v476 = vsub.s32 %v473, %v475
        %v477 = vrot.slane %v469, %v476
        %v479 = vunpack.c.l.s4 1983009808
        %v480 = vunpack.c.0.s8 %v479
        %v481 = vlaneseq
        %v482 = vshrl.u32 %v481, 7
        %v483 = vsub.s32 %v480, %v482
        %v484 = vrot.slane %v470, %v483
        %v485 = vcombine.low %v477, %v484
        %v486 = vcombine.low %v427, %v428
        %v487 = vcombine.low %v429, %v430
        %v489 = vunpack.c.l.s4 1983009808
        %v490 = vunpack.c.0.s8 %v489
        %v491 = vlaneseq
        %v492 = vshrl.u32 %v491, 7
        %v493 = vsub.s32 %v490, %v492
        %v494 = vrot.slane %v486, %v493
        %v496 = vunpack.c.l.s4 1983009808
        %v497 = vunpack.c.0.s8 %v496
        %v498 = vlaneseq
        %v499 = vshrl.u32 %v498, 7
        %v500 = vsub.s32 %v497, %v499
        %v501 = vrot.slane %v487, %v500
        %v502 = vcombine.low %v494, %v501
        %vm503 = vcmask 130048
        %v504 = vsel %vm503, %v485, 0
        %v506 = vsel %vm503, %v502, 0
        %508 = vmatprep.subr.mxu0 0.0
        %509 = vmatpush1.msra.mxu0 0.0
        %510 = vmatprep.subr.mxu0 0.0
        %511 = vmatpush1.msra.mxu0 0.0
        %512 = vmatprep.subr.mxu0 0.0
        %513 = vmatpush1.msra.mxu0 0.0
        %514 = vmatprep.subr.mxu0 0.0
        %515 = vmatpush1.msra.mxu0 0.0
        %516 = vmatprep.subr.mxu0 0.0
        %517 = vmatpush1.msra.mxu0 0.0
        %518 = vmatprep.subr.mxu0 0.0
        %519 = vmatpush1.msra.mxu0 0.0
        %520 = vmatprep.subr.mxu0 0.0
        %521 = vmatpush1.msra.mxu0 0.0
        %522 = vmatprep.subr.mxu0 0.0
        %523 = vmatpush1.msra.mxu0 0.0
        %524 = vmatprep.subr.mxu0 0.0
        %525 = vmatpush1.msra.mxu0 0.0
        %526 = vmatprep.subr.mxu0 0.0
        %527 = vmatpush1.msra.mxu0 0.0
        %528 = vmatprep.subr.mxu0 0.0
        %529 = vmatpush1.msra.mxu0 0.0
        %530 = vmatprep.subr.mxu0 0.0
        %531 = vmatpush1.msra.mxu0 0.0
        %532 = vmatprep.subr.mxu0 0.0
        %533 = vmatpush1.msra.mxu0 0.0
        %534 = vmatprep.subr.mxu0 0.0
        %535 = vmatpush1.msra.mxu0 0.0
        %536 = vmatprep.subr.mxu0 %v436
        %537 = vmatpush1.msra.mxu0 %v435
        %538 = vmatprep.subr.mxu0 %v432
        %539 = vmatpush1.msra.mxu0 %v431
        %540 = vmatprep.subr.mxu0 0.0
        %541 = vmatpush2.msra.mxu0 0.0
        %542 = vmatprep.subr.mxu0 0.0
        %543 = vmatpush2.msra.mxu0 0.0
        %544 = vmatprep.subr.mxu0 0.0
        %545 = vmatpush2.msra.mxu0 0.0
        %546 = vmatprep.subr.mxu0 0.0
        %547 = vmatpush2.msra.mxu0 0.0
        %548 = vmatprep.subr.mxu0 0.0
        %549 = vmatpush2.msra.mxu0 0.0
        %550 = vmatprep.subr.mxu0 0.0
        %551 = vmatpush2.msra.mxu0 0.0
        %552 = vmatprep.subr.mxu0 0.0
        %553 = vmatpush2.msra.mxu0 0.0
        %554 = vmatprep.subr.mxu0 0.0
        %555 = vmatpush2.msra.mxu0 0.0
        %556 = vmatprep.subr.mxu0 0.0
        %557 = vmatpush2.msra.mxu0 0.0
        %558 = vmatprep.subr.mxu0 0.0
        %559 = vmatpush2.msra.mxu0 0.0
        %560 = vmatprep.subr.mxu0 0.0
        %561 = vmatpush2.msra.mxu0 0.0
        %562 = vmatprep.subr.mxu0 0.0
        %563 = vmatpush2.msra.mxu0 0.0
        %564 = vmatprep.subr.mxu0 0.0
        %565 = vmatpush2.msra.mxu0 0.0
        %566 = vmatprep.subr.mxu0 0.0
        %567 = vmatpush2.msra.mxu0 0.0
        %568 = vmatprep.subr.mxu0 0.0
        %569 = vmatpush2.msra.mxu0 0.0
        %570 = vmatprep.subr.mxu0 0.0
        %571 = vmatpush2.msra.mxu0 0.0
        %572 = vmatprep.mubr.f32.mxu0 0.0
        %573 = vmatmul.mubr.f32.gmra.mxu0 %v504
        %v574 = vpop.f32.mrf.mxu0
        %v575 = vadd.f32 %v444, %v574
        %v576 = vpop.f32.mrf.mxu0
        %v577 = vadd.f32 %v448, %v576
        %578 = vmatprep.mubr.f32.mxu0 0.0
        %579 = vmatmul.mubr.f32.gmra.mxu0 %v506
        %v580 = vpop.f32.mrf.mxu0
        %v581 = vadd.f32 %v444, %v580
        %v582 = vpop.f32.mrf.mxu0
        %v583 = vadd.f32 %v448, %v582
        %584 = vdwg.mxu0
        %585 = vmatprep.subr.mxu0 0.0
        %586 = vmatpush1.msra.mxu0 0.0
        %587 = vmatprep.subr.mxu0 0.0
        %588 = vmatpush1.msra.mxu0 0.0
        %589 = vmatprep.subr.mxu0 0.0
        %590 = vmatpush1.msra.mxu0 0.0
        %591 = vmatprep.subr.mxu0 0.0
        %592 = vmatpush1.msra.mxu0 0.0
        %593 = vmatprep.subr.mxu0 0.0
        %594 = vmatpush1.msra.mxu0 0.0
        %595 = vmatprep.subr.mxu0 0.0
        %596 = vmatpush1.msra.mxu0 0.0
        %597 = vmatprep.subr.mxu0 0.0
        %598 = vmatpush1.msra.mxu0 0.0
        %599 = vmatprep.subr.mxu0 0.0
        %600 = vmatpush1.msra.mxu0 0.0
        %601 = vmatprep.subr.mxu0 0.0
        %602 = vmatpush1.msra.mxu0 0.0
        %603 = vmatprep.subr.mxu0 0.0
        %604 = vmatpush1.msra.mxu0 0.0
        %605 = vmatprep.subr.mxu0 0.0
        %606 = vmatpush1.msra.mxu0 0.0
        %607 = vmatprep.subr.mxu0 0.0
        %608 = vmatpush1.msra.mxu0 0.0
        %609 = vmatprep.subr.mxu0 0.0
        %610 = vmatpush1.msra.mxu0 0.0
        %611 = vmatprep.subr.mxu0 0.0
        %612 = vmatpush1.msra.mxu0 0.0
        %613 = vmatprep.subr.mxu0 %v438
        %614 = vmatpush1.msra.mxu0 %v437
        %615 = vmatprep.subr.mxu0 %v434
        %616 = vmatpush1.msra.mxu0 %v433
        %617 = vmatprep.subr.mxu0 0.0
        %618 = vmatpush2.msra.mxu0 0.0
        %619 = vmatprep.subr.mxu0 0.0
        %620 = vmatpush2.msra.mxu0 0.0
        %621 = vmatprep.subr.mxu0 0.0
        %622 = vmatpush2.msra.mxu0 0.0
        %623 = vmatprep.subr.mxu0 0.0
        %624 = vmatpush2.msra.mxu0 0.0
        %625 = vmatprep.subr.mxu0 0.0
        %626 = vmatpush2.msra.mxu0 0.0
        %627 = vmatprep.subr.mxu0 0.0
        %628 = vmatpush2.msra.mxu0 0.0
        %629 = vmatprep.subr.mxu0 0.0
        %630 = vmatpush2.msra.mxu0 0.0
        %631 = vmatprep.subr.mxu0 0.0
        %632 = vmatpush2.msra.mxu0 0.0
        %633 = vmatprep.subr.mxu0 0.0
        %634 = vmatpush2.msra.mxu0 0.0
        %635 = vmatprep.subr.mxu0 0.0
        %636 = vmatpush2.msra.mxu0 0.0
        %637 = vmatprep.subr.mxu0 0.0
        %638 = vmatpush2.msra.mxu0 0.0
        %639 = vmatprep.subr.mxu0 0.0
        %640 = vmatpush2.msra.mxu0 0.0
        %641 = vmatprep.subr.mxu0 0.0
        %642 = vmatpush2.msra.mxu0 0.0
        %643 = vmatprep.subr.mxu0 0.0
        %644 = vmatpush2.msra.mxu0 0.0
        %645 = vmatprep.subr.mxu0 0.0
        %646 = vmatpush2.msra.mxu0 0.0
        %647 = vmatprep.subr.mxu0 0.0
        %648 = vmatpush2.msra.mxu0 0.0
        %649 = vmatprep.mubr.f32.mxu0 0.0
        %650 = vmatmul.mubr.f32.gmra.mxu0 %v504
        %v651 = vpop.f32.mrf.mxu0
        %v652 = vadd.f32 %v452, %v651
        %v653 = vpop.f32.mrf.mxu0
        %v654 = vadd.f32 %v456, %v653
        %655 = vmatprep.mubr.f32.mxu0 0.0
        %656 = vmatmul.mubr.f32.gmra.mxu0 %v506
        %v657 = vpop.f32.mrf.mxu0
        %v658 = vadd.f32 %v452, %v657
        %v659 = vpop.f32.mrf.mxu0
        %v660 = vadd.f32 %v456, %v659
        %661 = vdwg.mxu0
        %v662 = vld [vmem:[#allocation8] sm:$0xff]
        %v663 = vld [vmem:[#allocation8 + $0x8] sm:$0xff]
        %v664 = vld [vmem:[#allocation8 + $0x10] sm:$0xff]
        %v665 = vld [vmem:[#allocation8 + $0x18] sm:$0xff]
        %v666 = vld [vmem:[#allocation8 + $0x20] sm:$0xff]
        %v667 = vld [vmem:[#allocation8 + $0x28] sm:$0xff]
        %v668 = vld [vmem:[#allocation8 + $0x30] sm:$0xff]
        %v669 = vld [vmem:[#allocation8 + $0x38] sm:$0xff]
        %v670 = vld [vmem:[#allocation8 + $0x40] sm:$0xff]
        %v671 = vld [vmem:[#allocation8 + $0x48] sm:$0xff]
        %v672 = vld [vmem:[#allocation8 + $0x50] sm:$0xff]
        %v673 = vld [vmem:[#allocation8 + $0x58] sm:$0xff]
        %v674 = vld [vmem:[#allocation8 + $0x60] sm:$0xff]
        %v675 = vld [vmem:[#allocation8 + $0x68] sm:$0xff]
        %v676 = vld [vmem:[#allocation8 + $0x70] sm:$0xff]
        %v677 = vld [vmem:[#allocation8 + $0x78] sm:$0xff]
        %v678 = vld [vmem:[#allocation8 + $0x80] sm:$0xff]
        %v679 = vld [vmem:[#allocation8 + $0x88] sm:$0xff]
        %v680 = vld [vmem:[#allocation8 + $0x90] sm:$0xff]
        %v681 = vld [vmem:[#allocation8 + $0x98] sm:$0xff]
        %v682 = vld [vmem:[#allocation8 + $0xa0] sm:$0xff]
        %v683 = vld [vmem:[#allocation8 + $0xa8] sm:$0xff]
        %v684 = vld [vmem:[#allocation8 + $0xb0] sm:$0xff]
        %v685 = vld [vmem:[#allocation8 + $0xb8] sm:$0xff]
        %v686 = vld [vmem:[#allocation8 + $0xc0] sm:$0xff]
        %v687 = vld [vmem:[#allocation8 + $0xc8] sm:$0xff]
        %v688 = vld [vmem:[#allocation8 + $0xd0] sm:$0xff]
        %v689 = vld [vmem:[#allocation8 + $0xd8] sm:$0xff]
        %v690 = vld [vmem:[#allocation8 + $0xe0] sm:$0xff]
        %v691 = vld [vmem:[#allocation8 + $0xe8] sm:$0xff]
        %v692 = vld [vmem:[#allocation8 + $0xf0] sm:$0xff]
        %v693 = vld [vmem:[#allocation8 + $0xf8] sm:$0xff]
        %v694 = vld [vmem:[#allocation8 + $0x100] sm:$0xff]
        %v695 = vld [vmem:[#allocation8 + $0x108] sm:$0xff]
        %v696 = vld [vmem:[#allocation8 + $0x110] sm:$0xff]
        %v697 = vld [vmem:[#allocation8 + $0x118] sm:$0xff]
        %v698 = vld [vmem:[#allocation8 + $0x120] sm:$0xff]
        %v699 = vld [vmem:[#allocation8 + $0x128] sm:$0xff]
        %v700 = vld [vmem:[#allocation8 + $0x130] sm:$0xff]
        %v701 = vld [vmem:[#allocation8 + $0x138] sm:$0xff]
        %v702 = vld [vmem:[#allocation8 + $0x140] sm:$0xff]
        %v703 = vld [vmem:[#allocation8 + $0x148] sm:$0xff]
        %v704 = vld [vmem:[#allocation8 + $0x150] sm:$0xff]
        %v705 = vld [vmem:[#allocation8 + $0x158] sm:$0xff]
        %v706 = vld [vmem:[#allocation8 + $0x160] sm:$0xff]
        %v707 = vld [vmem:[#allocation8 + $0x168] sm:$0xff]
        %v708 = vld [vmem:[#allocation8 + $0x170] sm:$0xff]
        %v709 = vld [vmem:[#allocation8 + $0x178] sm:$0xff]
        %v710 = vld [vmem:[#allocation8 + $0x180] sm:$0xff]
        %v711 = vld [vmem:[#allocation8 + $0x188] sm:$0xff]
        %v712 = vld [vmem:[#allocation8 + $0x190] sm:$0xff]
        %v713 = vld [vmem:[#allocation8 + $0x198] sm:$0xff]
        %v714 = vld [vmem:[#allocation8 + $0x1a0] sm:$0xff]
        %v715 = vld [vmem:[#allocation8 + $0x1a8] sm:$0xff]
        %v716 = vld [vmem:[#allocation8 + $0x1b0] sm:$0xff]
        %v717 = vld [vmem:[#allocation8 + $0x1b8] sm:$0xff]
        %v718 = vld [vmem:[#allocation8 + $0x1c0] sm:$0xff]
        %v719 = vld [vmem:[#allocation8 + $0x1c8] sm:$0xff]
        %v720 = vld [vmem:[#allocation8 + $0x1d0] sm:$0xff]
        %v721 = vld [vmem:[#allocation8 + $0x1d8] sm:$0xff]
        %v722 = vld [vmem:[#allocation8 + $0x1e0] sm:$0xff]
        %v723 = vld [vmem:[#allocation8 + $0x1e8] sm:$0xff]
        %v724 = vld [vmem:[#allocation8 + $0x1f0] sm:$0xff]
        %v725 = vld [vmem:[#allocation8 + $0x1f8] sm:$0xff]
        %v726 = vld [vmem:[#allocation11] sm:$0x3]
        %v727 = vld [vmem:[#allocation13] sm:$0x3]
        %728 = vmatprep.subr.mxu0 %v723
        %729 = vmatpush1.msra.mxu0 %v722
        %730 = vmatprep.subr.mxu0 %v719
        %731 = vmatpush1.msra.mxu0 %v718
        %732 = vmatprep.subr.mxu0 %v715
        %733 = vmatpush1.msra.mxu0 %v714
        %734 = vmatprep.subr.mxu0 %v711
        %735 = vmatpush1.msra.mxu0 %v710
        %736 = vmatprep.subr.mxu0 %v707
        %737 = vmatpush1.msra.mxu0 %v706
        %738 = vmatprep.subr.mxu0 %v703
        %739 = vmatpush1.msra.mxu0 %v702
        %740 = vmatprep.subr.mxu0 %v699
        %741 = vmatpush1.msra.mxu0 %v698
        %742 = vmatprep.subr.mxu0 %v695
        %743 = vmatpush1.msra.mxu0 %v694
        %744 = vmatprep.subr.mxu0 %v691
        %745 = vmatpush1.msra.mxu0 %v690
        %746 = vmatprep.subr.mxu0 %v687
        %747 = vmatpush1.msra.mxu0 %v686
        %748 = vmatprep.subr.mxu0 %v683
        %749 = vmatpush1.msra.mxu0 %v682
        %750 = vmatprep.subr.mxu0 %v679
        %751 = vmatpush1.msra.mxu0 %v678
        %752 = vmatprep.subr.mxu0 %v675
        %753 = vmatpush1.msra.mxu0 %v674
        %754 = vmatprep.subr.mxu0 %v671
        %755 = vmatpush1.msra.mxu0 %v670
        %756 = vmatprep.subr.mxu0 %v667
        %757 = vmatpush1.msra.mxu0 %v666
        %758 = vmatprep.subr.mxu0 %v663
        %759 = vmatpush1.msra.mxu0 %v662
        %760 = vmatprep.subr.mxu0 0.0
        %761 = vmatpush2.msra.mxu0 0.0
        %762 = vmatprep.subr.mxu0 0.0
        %763 = vmatpush2.msra.mxu0 0.0
        %764 = vmatprep.subr.mxu0 0.0
        %765 = vmatpush2.msra.mxu0 0.0
        %766 = vmatprep.subr.mxu0 0.0
        %767 = vmatpush2.msra.mxu0 0.0
        %768 = vmatprep.subr.mxu0 0.0
        %769 = vmatpush2.msra.mxu0 0.0
        %770 = vmatprep.subr.mxu0 0.0
        %771 = vmatpush2.msra.mxu0 0.0
        %772 = vmatprep.subr.mxu0 0.0
        %773 = vmatpush2.msra.mxu0 0.0
        %774 = vmatprep.subr.mxu0 0.0
        %775 = vmatpush2.msra.mxu0 0.0
        %776 = vmatprep.subr.mxu0 0.0
        %777 = vmatpush2.msra.mxu0 0.0
        %778 = vmatprep.subr.mxu0 0.0
        %779 = vmatpush2.msra.mxu0 0.0
        %780 = vmatprep.subr.mxu0 0.0
        %781 = vmatpush2.msra.mxu0 0.0
        %782 = vmatprep.subr.mxu0 0.0
        %783 = vmatpush2.msra.mxu0 0.0
        %784 = vmatprep.subr.mxu0 0.0
        %785 = vmatpush2.msra.mxu0 0.0
        %786 = vmatprep.subr.mxu0 0.0
        %787 = vmatpush2.msra.mxu0 0.0
        %788 = vmatprep.subr.mxu0 0.0
        %789 = vmatpush2.msra.mxu0 0.0
        %790 = vmatprep.subr.mxu0 0.0
        %791 = vmatpush2.msra.mxu0 0.0
        %792 = vmatprep.mubr.f32.mxu0 0.0
        %793 = vmatmul.mubr.f32.gmra.mxu0 %v726
        %v794 = vpop.f32.mrf.mxu0
        %v795 = vadd.f32 0.0, %v794
        %v796 = vpop.f32.mrf.mxu0
        %v797 = vadd.f32 0.0, %v796
        %798 = vdwg.mxu0
        %799 = vmatprep.subr.mxu0 %v725
        %800 = vmatpush1.msra.mxu0 %v724
        %801 = vmatprep.subr.mxu0 %v721
        %802 = vmatpush1.msra.mxu0 %v720
        %803 = vmatprep.subr.mxu0 %v717
        %804 = vmatpush1.msra.mxu0 %v716
        %805 = vmatprep.subr.mxu0 %v713
        %806 = vmatpush1.msra.mxu0 %v712
        %807 = vmatprep.subr.mxu0 %v709
        %808 = vmatpush1.msra.mxu0 %v708
        %809 = vmatprep.subr.mxu0 %v705
        %810 = vmatpush1.msra.mxu0 %v704
        %811 = vmatprep.subr.mxu0 %v701
        %812 = vmatpush1.msra.mxu0 %v700
        %813 = vmatprep.subr.mxu0 %v697
        %814 = vmatpush1.msra.mxu0 %v696
        %815 = vmatprep.subr.mxu0 %v693
        %816 = vmatpush1.msra.mxu0 %v692
        %817 = vmatprep.subr.mxu0 %v689
        %818 = vmatpush1.msra.mxu0 %v688
        %819 = vmatprep.subr.mxu0 %v685
        %820 = vmatpush1.msra.mxu0 %v684
        %821 = vmatprep.subr.mxu0 %v681
        %822 = vmatpush1.msra.mxu0 %v680
        %823 = vmatprep.subr.mxu0 %v677
        %824 = vmatpush1.msra.mxu0 %v676
        %825 = vmatprep.subr.mxu0 %v673
        %826 = vmatpush1.msra.mxu0 %v672
        %827 = vmatprep.subr.mxu0 %v669
        %828 = vmatpush1.msra.mxu0 %v668
        %829 = vmatprep.subr.mxu0 %v665
        %830 = vmatpush1.msra.mxu0 %v664
        %831 = vmatprep.subr.mxu0 0.0
        %832 = vmatpush2.msra.mxu0 0.0
        %833 = vmatprep.subr.mxu0 0.0
        %834 = vmatpush2.msra.mxu0 0.0
        %835 = vmatprep.subr.mxu0 0.0
        %836 = vmatpush2.msra.mxu0 0.0
        %837 = vmatprep.subr.mxu0 0.0
        %838 = vmatpush2.msra.mxu0 0.0
        %839 = vmatprep.subr.mxu0 0.0
        %840 = vmatpush2.msra.mxu0 0.0
        %841 = vmatprep.subr.mxu0 0.0
        %842 = vmatpush2.msra.mxu0 0.0
        %843 = vmatprep.subr.mxu0 0.0
        %844 = vmatpush2.msra.mxu0 0.0
        %845 = vmatprep.subr.mxu0 0.0
        %846 = vmatpush2.msra.mxu0 0.0
        %847 = vmatprep.subr.mxu0 0.0
        %848 = vmatpush2.msra.mxu0 0.0
        %849 = vmatprep.subr.mxu0 0.0
        %850 = vmatpush2.msra.mxu0 0.0
        %851 = vmatprep.subr.mxu0 0.0
        %852 = vmatpush2.msra.mxu0 0.0
        %853 = vmatprep.subr.mxu0 0.0
        %854 = vmatpush2.msra.mxu0 0.0
        %855 = vmatprep.subr.mxu0 0.0
        %856 = vmatpush2.msra.mxu0 0.0
        %857 = vmatprep.subr.mxu0 0.0
        %858 = vmatpush2.msra.mxu0 0.0
        %859 = vmatprep.subr.mxu0 0.0
        %860 = vmatpush2.msra.mxu0 0.0
        %861 = vmatprep.subr.mxu0 0.0
        %862 = vmatpush2.msra.mxu0 0.0
        %863 = vmatprep.mubr.f32.mxu0 0.0
        %864 = vmatmul.mubr.f32.gmra.mxu0 %v726
        %v865 = vpop.f32.mrf.mxu0
        %v866 = vadd.f32 0.0, %v865
        %v867 = vpop.f32.mrf.mxu0
        %v868 = vadd.f32 0.0, %v867
        %869 = vdwg.mxu0
        %v870 = vadd.f32 %v575, %v795
        %v871 = vadd.f32 %v577, %v797
        %v872 = vadd.f32 %v652, %v866
        %v873 = vadd.f32 %v654, %v868
        %v874 = vxor.u32 %v870, 2147483648
        %v875 = vmul.f32 %v874, 1.442695
        %v876 = vpow.pop %v875
        %v877 = vadd.f32 %v876, 1.0
        %v878 = vrcp.pop %v877
        %v879 = vmul.f32 1.0, %v878
        %v880 = vxor.u32 %v871, 2147483648
        %v881 = vmul.f32 %v880, 1.442695
        %v882 = vpow.pop %v881
        %v883 = vadd.f32 %v882, 1.0
        %v884 = vrcp.pop %v883
        %v885 = vmul.f32 1.0, %v884
        %v886 = vtanh.pop %v872
        %v887 = vxor.u32 %v873, 2147483648
        %v888 = vmul.f32 %v887, 1.442695
        %v889 = vpow.pop %v888
        %v890 = vadd.f32 %v889, 1.0
        %v891 = vrcp.pop %v890
        %v892 = vmul.f32 1.0, %v891
        %v893 = vmul.f32 %v885, %v727
        %v894 = vmul.f32 %v879, %v886
        %v895 = vadd.f32 %v893, %v894
        %v896 = vtanh.pop %v895
        %v897 = vmul.f32 %v892, %v896
        %898 = vmatprep.subr.mxu0 %v723
        %899 = vmatpush1.msra.mxu0 %v722
        %900 = vmatprep.subr.mxu0 %v719
        %901 = vmatpush1.msra.mxu0 %v718
        %902 = vmatprep.subr.mxu0 %v715
        %903 = vmatpush1.msra.mxu0 %v714
        %904 = vmatprep.subr.mxu0 %v711
        %905 = vmatpush1.msra.mxu0 %v710
        %906 = vmatprep.subr.mxu0 %v707
        %907 = vmatpush1.msra.mxu0 %v706
        %908 = vmatprep.subr.mxu0 %v703
        %909 = vmatpush1.msra.mxu0 %v702
        %910 = vmatprep.subr.mxu0 %v699
        %911 = vmatpush1.msra.mxu0 %v698
        %912 = vmatprep.subr.mxu0 %v695
        %913 = vmatpush1.msra.mxu0 %v694
        %914 = vmatprep.subr.mxu0 %v691
        %915 = vmatpush1.msra.mxu0 %v690
        %916 = vmatprep.subr.mxu0 %v687
        %917 = vmatpush1.msra.mxu0 %v686
        %918 = vmatprep.subr.mxu0 %v683
        %919 = vmatpush1.msra.mxu0 %v682
        %920 = vmatprep.subr.mxu0 %v679
        %921 = vmatpush1.msra.mxu0 %v678
        %922 = vmatprep.subr.mxu0 %v675
        %923 = vmatpush1.msra.mxu0 %v674
        %924 = vmatprep.subr.mxu0 %v671
        %925 = vmatpush1.msra.mxu0 %v670
        %926 = vmatprep.subr.mxu0 %v667
        %927 = vmatpush1.msra.mxu0 %v666
        %928 = vmatprep.subr.mxu0 %v663
        %929 = vmatpush1.msra.mxu0 %v662
        %930 = vmatprep.subr.mxu0 0.0
        %931 = vmatpush2.msra.mxu0 0.0
        %932 = vmatprep.subr.mxu0 0.0
        %933 = vmatpush2.msra.mxu0 0.0
        %934 = vmatprep.subr.mxu0 0.0
        %935 = vmatpush2.msra.mxu0 0.0
        %936 = vmatprep.subr.mxu0 0.0
        %937 = vmatpush2.msra.mxu0 0.0
        %938 = vmatprep.subr.mxu0 0.0
        %939 = vmatpush2.msra.mxu0 0.0
        %940 = vmatprep.subr.mxu0 0.0
        %941 = vmatpush2.msra.mxu0 0.0
        %942 = vmatprep.subr.mxu0 0.0
        %943 = vmatpush2.msra.mxu0 0.0
        %944 = vmatprep.subr.mxu0 0.0
        %945 = vmatpush2.msra.mxu0 0.0
        %946 = vmatprep.subr.mxu0 0.0
        %947 = vmatpush2.msra.mxu0 0.0
        %948 = vmatprep.subr.mxu0 0.0
        %949 = vmatpush2.msra.mxu0 0.0
        %950 = vmatprep.subr.mxu0 0.0
        %951 = vmatpush2.msra.mxu0 0.0
        %952 = vmatprep.subr.mxu0 0.0
        %953 = vmatpush2.msra.mxu0 0.0
        %954 = vmatprep.subr.mxu0 0.0
        %955 = vmatpush2.msra.mxu0 0.0
        %956 = vmatprep.subr.mxu0 0.0
        %957 = vmatpush2.msra.mxu0 0.0
        %958 = vmatprep.subr.mxu0 0.0
        %959 = vmatpush2.msra.mxu0 0.0
        %960 = vmatprep.subr.mxu0 0.0
        %961 = vmatpush2.msra.mxu0 0.0
        %962 = vmatprep.mubr.f32.mxu0 0.0
        %963 = vmatmul.mubr.f32.gmra.mxu0 %v897
        %v964 = vpop.f32.mrf.mxu0
        %v965 = vadd.f32 0.0, %v964
        %v966 = vpop.f32.mrf.mxu0
        %v967 = vadd.f32 0.0, %v966
        %968 = vdwg.mxu0
        %969 = vmatprep.subr.mxu0 %v725
        %970 = vmatpush1.msra.mxu0 %v724
        %971 = vmatprep.subr.mxu0 %v721
        %972 = vmatpush1.msra.mxu0 %v720
        %973 = vmatprep.subr.mxu0 %v717
        %974 = vmatpush1.msra.mxu0 %v716
        %975 = vmatprep.subr.mxu0 %v713
        %976 = vmatpush1.msra.mxu0 %v712
        %977 = vmatprep.subr.mxu0 %v709
        %978 = vmatpush1.msra.mxu0 %v708
        %979 = vmatprep.subr.mxu0 %v705
        %980 = vmatpush1.msra.mxu0 %v704
        %981 = vmatprep.subr.mxu0 %v701
        %982 = vmatpush1.msra.mxu0 %v700
        %983 = vmatprep.subr.mxu0 %v697
        %984 = vmatpush1.msra.mxu0 %v696
        %985 = vmatprep.subr.mxu0 %v693
        %986 = vmatpush1.msra.mxu0 %v692
        %987 = vmatprep.subr.mxu0 %v689
        %988 = vmatpush1.msra.mxu0 %v688
        %989 = vmatprep.subr.mxu0 %v685
        %990 = vmatpush1.msra.mxu0 %v684
        %991 = vmatprep.subr.mxu0 %v681
        %992 = vmatpush1.msra.mxu0 %v680
        %993 = vmatprep.subr.mxu0 %v677
        %994 = vmatpush1.msra.mxu0 %v676
        %995 = vmatprep.subr.mxu0 %v673
        %996 = vmatpush1.msra.mxu0 %v672
        %997 = vmatprep.subr.mxu0 %v669
        %998 = vmatpush1.msra.mxu0 %v668
        %999 = vmatprep.subr.mxu0 %v665
        %1000 = vmatpush1.msra.mxu0 %v664
        %1001 = vmatprep.subr.mxu0 0.0
        %1002 = vmatpush2.msra.mxu0 0.0
        %1003 = vmatprep.subr.mxu0 0.0
        %1004 = vmatpush2.msra.mxu0 0.0
        %1005 = vmatprep.subr.mxu0 0.0
        %1006 = vmatpush2.msra.mxu0 0.0
        %1007 = vmatprep.subr.mxu0 0.0
        %1008 = vmatpush2.msra.mxu0 0.0
        %1009 = vmatprep.subr.mxu0 0.0
        %1010 = vmatpush2.msra.mxu0 0.0
        %1011 = vmatprep.subr.mxu0 0.0
        %1012 = vmatpush2.msra.mxu0 0.0
        %1013 = vmatprep.subr.mxu0 0.0
        %1014 = vmatpush2.msra.mxu0 0.0
        %1015 = vmatprep.subr.mxu0 0.0
        %1016 = vmatpush2.msra.mxu0 0.0
        %1017 = vmatprep.subr.mxu0 0.0
        %1018 = vmatpush2.msra.mxu0 0.0
        %1019 = vmatprep.subr.mxu0 0.0
        %1020 = vmatpush2.msra.mxu0 0.0
        %1021 = vmatprep.subr.mxu0 0.0
        %1022 = vmatpush2.msra.mxu0 0.0
        %1023 = vmatprep.subr.mxu0 0.0
        %1024 = vmatpush2.msra.mxu0 0.0
        %1025 = vmatprep.subr.mxu0 0.0
        %1026 = vmatpush2.msra.mxu0 0.0
        %1027 = vmatprep.subr.mxu0 0.0
        %1028 = vmatpush2.msra.mxu0 0.0
        %1029 = vmatprep.subr.mxu0 0.0
        %1030 = vmatpush2.msra.mxu0 0.0
        %1031 = vmatprep.subr.mxu0 0.0
        %1032 = vmatpush2.msra.mxu0 0.0
        %1033 = vmatprep.mubr.f32.mxu0 0.0
        %1034 = vmatmul.mubr.f32.gmra.mxu0 %v897
        %v1035 = vpop.f32.mrf.mxu0
        %v1036 = vadd.f32 0.0, %v1035
        %v1037 = vpop.f32.mrf.mxu0
        %v1038 = vadd.f32 0.0, %v1037
        %1039 = vdwg.mxu0
        %v1044 = vrot.slane %v965, 6
        %v1045 = vrot.slane %v967, 6
        %v1046 = vrot.slane %v1036, 6
        %v1047 = vrot.slane %v1038, 6
        %v1052 = vadd.f32 %v575, %v1044
        %v1053 = vadd.f32 %v577, %v1045
        %v1054 = vadd.f32 %v652, %v1046
        %v1055 = vadd.f32 %v654, %v1047
        %v1056 = vxor.u32 %v1052, 2147483648
        %v1057 = vmul.f32 %v1056, 1.442695
        %v1058 = vpow.pop %v1057
        %v1059 = vadd.f32 %v1058, 1.0
        %v1060 = vrcp.pop %v1059
        %v1061 = vmul.f32 1.0, %v1060
        %v1062 = vxor.u32 %v1053, 2147483648
        %v1063 = vmul.f32 %v1062, 1.442695
        %v1064 = vpow.pop %v1063
        %v1065 = vadd.f32 %v1064, 1.0
        %v1066 = vrcp.pop %v1065
        %v1067 = vmul.f32 1.0, %v1066
        %v1068 = vtanh.pop %v1054
        %v1069 = vxor.u32 %v1055, 2147483648
        %v1070 = vmul.f32 %v1069, 1.442695
        %v1071 = vpow.pop %v1070
        %v1072 = vadd.f32 %v1071, 1.0
        %v1073 = vrcp.pop %v1072
        %v1074 = vmul.f32 1.0, %v1073
        %v1076 = vrot.slane %v895, 6
        %v1078 = vmul.f32 %v1067, %v1076
        %v1079 = vmul.f32 %v1061, %v1068
        %v1080 = vadd.f32 %v1078, %v1079
        %v1081 = vtanh.pop %v1080
        %v1082 = vmul.f32 %v1074, %v1081
        %v1084 = vrot.slane %v1082, 2
        %1086 = vmatprep.subr.mxu0 %v723
        %1087 = vmatpush1.msra.mxu0 %v722
        %1088 = vmatprep.subr.mxu0 %v719
        %1089 = vmatpush1.msra.mxu0 %v718
        %1090 = vmatprep.subr.mxu0 %v715
        %1091 = vmatpush1.msra.mxu0 %v714
        %1092 = vmatprep.subr.mxu0 %v711
        %1093 = vmatpush1.msra.mxu0 %v710
        %1094 = vmatprep.subr.mxu0 %v707
        %1095 = vmatpush1.msra.mxu0 %v706
        %1096 = vmatprep.subr.mxu0 %v703
        %1097 = vmatpush1.msra.mxu0 %v702
        %1098 = vmatprep.subr.mxu0 %v699
        %1099 = vmatpush1.msra.mxu0 %v698
        %1100 = vmatprep.subr.mxu0 %v695
        %1101 = vmatpush1.msra.mxu0 %v694
        %1102 = vmatprep.subr.mxu0 %v691
        %1103 = vmatpush1.msra.mxu0 %v690
        %1104 = vmatprep.subr.mxu0 %v687
        %1105 = vmatpush1.msra.mxu0 %v686
        %1106 = vmatprep.subr.mxu0 %v683
        %1107 = vmatpush1.msra.mxu0 %v682
        %1108 = vmatprep.subr.mxu0 %v679
        %1109 = vmatpush1.msra.mxu0 %v678
        %1110 = vmatprep.subr.mxu0 %v675
        %1111 = vmatpush1.msra.mxu0 %v674
        %1112 = vmatprep.subr.mxu0 %v671
        %1113 = vmatpush1.msra.mxu0 %v670
        %1114 = vmatprep.subr.mxu0 %v667
        %1115 = vmatpush1.msra.mxu0 %v666
        %1116 = vmatprep.subr.mxu0 %v663
        %1117 = vmatpush1.msra.mxu0 %v662
        %1118 = vmatprep.subr.mxu0 0.0
        %1119 = vmatpush2.msra.mxu0 0.0
        %1120 = vmatprep.subr.mxu0 0.0
        %1121 = vmatpush2.msra.mxu0 0.0
        %1122 = vmatprep.subr.mxu0 0.0
        %1123 = vmatpush2.msra.mxu0 0.0
        %1124 = vmatprep.subr.mxu0 0.0
        %1125 = vmatpush2.msra.mxu0 0.0
        %1126 = vmatprep.subr.mxu0 0.0
        %1127 = vmatpush2.msra.mxu0 0.0
        %1128 = vmatprep.subr.mxu0 0.0
        %1129 = vmatpush2.msra.mxu0 0.0
        %1130 = vmatprep.subr.mxu0 0.0
        %1131 = vmatpush2.msra.mxu0 0.0
        %1132 = vmatprep.subr.mxu0 0.0
        %1133 = vmatpush2.msra.mxu0 0.0
        %1134 = vmatprep.subr.mxu0 0.0
        %1135 = vmatpush2.msra.mxu0 0.0
        %1136 = vmatprep.subr.mxu0 0.0
        %1137 = vmatpush2.msra.mxu0 0.0
        %1138 = vmatprep.subr.mxu0 0.0
        %1139 = vmatpush2.msra.mxu0 0.0
        %1140 = vmatprep.subr.mxu0 0.0
        %1141 = vmatpush2.msra.mxu0 0.0
        %1142 = vmatprep.subr.mxu0 0.0
        %1143 = vmatpush2.msra.mxu0 0.0
        %1144 = vmatprep.subr.mxu0 0.0
        %1145 = vmatpush2.msra.mxu0 0.0
        %1146 = vmatprep.subr.mxu0 0.0
        %1147 = vmatpush2.msra.mxu0 0.0
        %1148 = vmatprep.subr.mxu0 0.0
        %1149 = vmatpush2.msra.mxu0 0.0
        %1150 = vmatprep.mubr.f32.mxu0 0.0
        %1151 = vmatmul.mubr.f32.gmra.mxu0 %v1084
        %v1152 = vpop.f32.mrf.mxu0
        %v1153 = vadd.f32 0.0, %v1152
        %v1154 = vpop.f32.mrf.mxu0
        %v1155 = vadd.f32 0.0, %v1154
        %1156 = vdwg.mxu0
        %1157 = vmatprep.subr.mxu0 %v725
        %1158 = vmatpush1.msra.mxu0 %v724
        %1159 = vmatprep.subr.mxu0 %v721
        %1160 = vmatpush1.msra.mxu0 %v720
        %1161 = vmatprep.subr.mxu0 %v717
        %1162 = vmatpush1.msra.mxu0 %v716
        %1163 = vmatprep.subr.mxu0 %v713
        %1164 = vmatpush1.msra.mxu0 %v712
        %1165 = vmatprep.subr.mxu0 %v709
        %1166 = vmatpush1.msra.mxu0 %v708
        %1167 = vmatprep.subr.mxu0 %v705
        %1168 = vmatpush1.msra.mxu0 %v704
        %1169 = vmatprep.subr.mxu0 %v701
        %1170 = vmatpush1.msra.mxu0 %v700
        %1171 = vmatprep.subr.mxu0 %v697
        %1172 = vmatpush1.msra.mxu0 %v696
        %1173 = vmatprep.subr.mxu0 %v693
        %1174 = vmatpush1.msra.mxu0 %v692
        %1175 = vmatprep.subr.mxu0 %v689
        %1176 = vmatpush1.msra.mxu0 %v688
        %1177 = vmatprep.subr.mxu0 %v685
        %1178 = vmatpush1.msra.mxu0 %v684
        %1179 = vmatprep.subr.mxu0 %v681
        %1180 = vmatpush1.msra.mxu0 %v680
        %1181 = vmatprep.subr.mxu0 %v677
        %1182 = vmatpush1.msra.mxu0 %v676
        %1183 = vmatprep.subr.mxu0 %v673
        %1184 = vmatpush1.msra.mxu0 %v672
        %1185 = vmatprep.subr.mxu0 %v669
        %1186 = vmatpush1.msra.mxu0 %v668
        %1187 = vmatprep.subr.mxu0 %v665
        %1188 = vmatpush1.msra.mxu0 %v664
        %1189 = vmatprep.subr.mxu0 0.0
        %1190 = vmatpush2.msra.mxu0 0.0
        %1191 = vmatprep.subr.mxu0 0.0
        %1192 = vmatpush2.msra.mxu0 0.0
        %1193 = vmatprep.subr.mxu0 0.0
        %1194 = vmatpush2.msra.mxu0 0.0
        %1195 = vmatprep.subr.mxu0 0.0
        %1196 = vmatpush2.msra.mxu0 0.0
        %1197 = vmatprep.subr.mxu0 0.0
        %1198 = vmatpush2.msra.mxu0 0.0
        %1199 = vmatprep.subr.mxu0 0.0
        %1200 = vmatpush2.msra.mxu0 0.0
        %1201 = vmatprep.subr.mxu0 0.0
        %1202 = vmatpush2.msra.mxu0 0.0
        %1203 = vmatprep.subr.mxu0 0.0
        %1204 = vmatpush2.msra.mxu0 0.0
        %1205 = vmatprep.subr.mxu0 0.0
        %1206 = vmatpush2.msra.mxu0 0.0
        %1207 = vmatprep.subr.mxu0 0.0
        %1208 = vmatpush2.msra.mxu0 0.0
        %1209 = vmatprep.subr.mxu0 0.0
        %1210 = vmatpush2.msra.mxu0 0.0
        %1211 = vmatprep.subr.mxu0 0.0
        %1212 = vmatpush2.msra.mxu0 0.0
        %1213 = vmatprep.subr.mxu0 0.0
        %1214 = vmatpush2.msra.mxu0 0.0
        %1215 = vmatprep.subr.mxu0 0.0
        %1216 = vmatpush2.msra.mxu0 0.0
        %1217 = vmatprep.subr.mxu0 0.0
        %1218 = vmatpush2.msra.mxu0 0.0
        %1219 = vmatprep.subr.mxu0 0.0
        %1220 = vmatpush2.msra.mxu0 0.0
        %1221 = vmatprep.mubr.f32.mxu0 0.0
        %1222 = vmatmul.mubr.f32.gmra.mxu0 %v1084
        %v1223 = vpop.f32.mrf.mxu0
        %v1224 = vadd.f32 0.0, %v1223
        %v1225 = vpop.f32.mrf.mxu0
        %v1226 = vadd.f32 0.0, %v1225
        %1227 = vdwg.mxu0
        %v1232 = vrot.slane %v1153, 4
        %v1233 = vrot.slane %v1155, 4
        %v1234 = vrot.slane %v1224, 4
        %v1235 = vrot.slane %v1226, 4
        %v1240 = vadd.f32 %v575, %v1232
        %v1241 = vadd.f32 %v577, %v1233
        %v1242 = vadd.f32 %v652, %v1234
        %v1243 = vadd.f32 %v654, %v1235
        %v1244 = vxor.u32 %v1240, 2147483648
        %v1245 = vmul.f32 %v1244, 1.442695
        %v1246 = vpow.pop %v1245
        %v1247 = vadd.f32 %v1246, 1.0
        %v1248 = vrcp.pop %v1247
        %v1249 = vmul.f32 1.0, %v1248
        %v1250 = vxor.u32 %v1241, 2147483648
        %v1251 = vmul.f32 %v1250, 1.442695
        %v1252 = vpow.pop %v1251
        %v1253 = vadd.f32 %v1252, 1.0
        %v1254 = vrcp.pop %v1253
        %v1255 = vmul.f32 1.0, %v1254
        %v1256 = vtanh.pop %v1242
        %v1257 = vxor.u32 %v1243, 2147483648
        %v1258 = vmul.f32 %v1257, 1.442695
        %v1259 = vpow.pop %v1258
        %v1260 = vadd.f32 %v1259, 1.0
        %v1261 = vrcp.pop %v1260
        %v1262 = vmul.f32 1.0, %v1261
        %v1264 = vrot.slane %v1080, 6
        %v1266 = vmul.f32 %v1255, %v1264
        %v1267 = vmul.f32 %v1249, %v1256
        %v1268 = vadd.f32 %v1266, %v1267
        %v1269 = vtanh.pop %v1268
        %v1270 = vmul.f32 %v1262, %v1269
        %v1272 = vrot.slane %v1270, 4
        %1274 = vmatprep.subr.mxu0 %v723
        %1275 = vmatpush1.msra.mxu0 %v722
        %1276 = vmatprep.subr.mxu0 %v719
        %1277 = vmatpush1.msra.mxu0 %v718
        %1278 = vmatprep.subr.mxu0 %v715
        %1279 = vmatpush1.msra.mxu0 %v714
        %1280 = vmatprep.subr.mxu0 %v711
        %1281 = vmatpush1.msra.mxu0 %v710
        %1282 = vmatprep.subr.mxu0 %v707
        %1283 = vmatpush1.msra.mxu0 %v706
        %1284 = vmatprep.subr.mxu0 %v703
        %1285 = vmatpush1.msra.mxu0 %v702
        %1286 = vmatprep.subr.mxu0 %v699
        %1287 = vmatpush1.msra.mxu0 %v698
        %1288 = vmatprep.subr.mxu0 %v695
        %1289 = vmatpush1.msra.mxu0 %v694
        %1290 = vmatprep.subr.mxu0 %v691
        %1291 = vmatpush1.msra.mxu0 %v690
        %1292 = vmatprep.subr.mxu0 %v687
        %1293 = vmatpush1.msra.mxu0 %v686
        %1294 = vmatprep.subr.mxu0 %v683
        %1295 = vmatpush1.msra.mxu0 %v682
        %1296 = vmatprep.subr.mxu0 %v679
        %1297 = vmatpush1.msra.mxu0 %v678
        %1298 = vmatprep.subr.mxu0 %v675
        %1299 = vmatpush1.msra.mxu0 %v674
        %1300 = vmatprep.subr.mxu0 %v671
        %1301 = vmatpush1.msra.mxu0 %v670
        %1302 = vmatprep.subr.mxu0 %v667
        %1303 = vmatpush1.msra.mxu0 %v666
        %1304 = vmatprep.subr.mxu0 %v663
        %1305 = vmatpush1.msra.mxu0 %v662
        %1306 = vmatprep.subr.mxu0 0.0
        %1307 = vmatpush2.msra.mxu0 0.0
        %1308 = vmatprep.subr.mxu0 0.0
        %1309 = vmatpush2.msra.mxu0 0.0
        %1310 = vmatprep.subr.mxu0 0.0
        %1311 = vmatpush2.msra.mxu0 0.0
        %1312 = vmatprep.subr.mxu0 0.0
        %1313 = vmatpush2.msra.mxu0 0.0
        %1314 = vmatprep.subr.mxu0 0.0
        %1315 = vmatpush2.msra.mxu0 0.0
        %1316 = vmatprep.subr.mxu0 0.0
        %1317 = vmatpush2.msra.mxu0 0.0
        %1318 = vmatprep.subr.mxu0 0.0
        %1319 = vmatpush2.msra.mxu0 0.0
        %1320 = vmatprep.subr.mxu0 0.0
        %1321 = vmatpush2.msra.mxu0 0.0
        %1322 = vmatprep.subr.mxu0 0.0
        %1323 = vmatpush2.msra.mxu0 0.0
        %1324 = vmatprep.subr.mxu0 0.0
        %1325 = vmatpush2.msra.mxu0 0.0
        %1326 = vmatprep.subr.mxu0 0.0
        %1327 = vmatpush2.msra.mxu0 0.0
        %1328 = vmatprep.subr.mxu0 0.0
        %1329 = vmatpush2.msra.mxu0 0.0
        %1330 = vmatprep.subr.mxu0 0.0
        %1331 = vmatpush2.msra.mxu0 0.0
        %1332 = vmatprep.subr.mxu0 0.0
        %1333 = vmatpush2.msra.mxu0 0.0
        %1334 = vmatprep.subr.mxu0 0.0
        %1335 = vmatpush2.msra.mxu0 0.0
        %1336 = vmatprep.subr.mxu0 0.0
        %1337 = vmatpush2.msra.mxu0 0.0
        %1338 = vmatprep.mubr.f32.mxu0 0.0
        %1339 = vmatmul.mubr.f32.gmra.mxu0 %v1272
        %v1340 = vpop.f32.mrf.mxu0
        %v1341 = vadd.f32 0.0, %v1340
        %v1342 = vpop.f32.mrf.mxu0
        %v1343 = vadd.f32 0.0, %v1342
        %1344 = vdwg.mxu0
        %1345 = vmatprep.subr.mxu0 %v725
        %1346 = vmatpush1.msra.mxu0 %v724
        %1347 = vmatprep.subr.mxu0 %v721
        %1348 = vmatpush1.msra.mxu0 %v720
        %1349 = vmatprep.subr.mxu0 %v717
        %1350 = vmatpush1.msra.mxu0 %v716
        %1351 = vmatprep.subr.mxu0 %v713
        %1352 = vmatpush1.msra.mxu0 %v712
        %1353 = vmatprep.subr.mxu0 %v709
        %1354 = vmatpush1.msra.mxu0 %v708
        %1355 = vmatprep.subr.mxu0 %v705
        %1356 = vmatpush1.msra.mxu0 %v704
        %1357 = vmatprep.subr.mxu0 %v701
        %1358 = vmatpush1.msra.mxu0 %v700
        %1359 = vmatprep.subr.mxu0 %v697
        %1360 = vmatpush1.msra.mxu0 %v696
        %1361 = vmatprep.subr.mxu0 %v693
        %1362 = vmatpush1.msra.mxu0 %v692
        %1363 = vmatprep.subr.mxu0 %v689
        %1364 = vmatpush1.msra.mxu0 %v688
        %1365 = vmatprep.subr.mxu0 %v685
        %1366 = vmatpush1.msra.mxu0 %v684
        %1367 = vmatprep.subr.mxu0 %v681
        %1368 = vmatpush1.msra.mxu0 %v680
        %1369 = vmatprep.subr.mxu0 %v677
        %1370 = vmatpush1.msra.mxu0 %v676
        %1371 = vmatprep.subr.mxu0 %v673
        %1372 = vmatpush1.msra.mxu0 %v672
        %1373 = vmatprep.subr.mxu0 %v669
        %1374 = vmatpush1.msra.mxu0 %v668
        %1375 = vmatprep.subr.mxu0 %v665
        %1376 = vmatpush1.msra.mxu0 %v664
        %1377 = vmatprep.subr.mxu0 0.0
        %1378 = vmatpush2.msra.mxu0 0.0
        %1379 = vmatprep.subr.mxu0 0.0
        %1380 = vmatpush2.msra.mxu0 0.0
        %1381 = vmatprep.subr.mxu0 0.0
        %1382 = vmatpush2.msra.mxu0 0.0
        %1383 = vmatprep.subr.mxu0 0.0
        %1384 = vmatpush2.msra.mxu0 0.0
        %1385 = vmatprep.subr.mxu0 0.0
        %1386 = vmatpush2.msra.mxu0 0.0
        %1387 = vmatprep.subr.mxu0 0.0
        %1388 = vmatpush2.msra.mxu0 0.0
        %1389 = vmatprep.subr.mxu0 0.0
        %1390 = vmatpush2.msra.mxu0 0.0
        %1391 = vmatprep.subr.mxu0 0.0
        %1392 = vmatpush2.msra.mxu0 0.0
        %1393 = vmatprep.subr.mxu0 0.0
        %1394 = vmatpush2.msra.mxu0 0.0
        %1395 = vmatprep.subr.mxu0 0.0
        %1396 = vmatpush2.msra.mxu0 0.0
        %1397 = vmatprep.subr.mxu0 0.0
        %1398 = vmatpush2.msra.mxu0 0.0
        %1399 = vmatprep.subr.mxu0 0.0
        %1400 = vmatpush2.msra.mxu0 0.0
        %1401 = vmatprep.subr.mxu0 0.0
        %1402 = vmatpush2.msra.mxu0 0.0
        %1403 = vmatprep.subr.mxu0 0.0
        %1404 = vmatpush2.msra.mxu0 0.0
        %1405 = vmatprep.subr.mxu0 0.0
        %1406 = vmatpush2.msra.mxu0 0.0
        %1407 = vmatprep.subr.mxu0 0.0
        %1408 = vmatpush2.msra.mxu0 0.0
        %1409 = vmatprep.mubr.f32.mxu0 0.0
        %1410 = vmatmul.mubr.f32.gmra.mxu0 %v1272
        %v1411 = vpop.f32.mrf.mxu0
        %v1412 = vadd.f32 0.0, %v1411
        %v1413 = vpop.f32.mrf.mxu0
        %v1414 = vadd.f32 0.0, %v1413
        %1415 = vdwg.mxu0
        %v1420 = vrot.slane %v1341, 2
        %v1421 = vrot.slane %v1343, 2
        %v1422 = vrot.slane %v1412, 2
        %v1423 = vrot.slane %v1414, 2
        %v1428 = vadd.f32 %v575, %v1420
        %v1429 = vadd.f32 %v577, %v1421
        %v1430 = vadd.f32 %v652, %v1422
        %v1431 = vadd.f32 %v654, %v1423
        %v1432 = vxor.u32 %v1428, 2147483648
        %v1433 = vmul.f32 %v1432, 1.442695
        %v1434 = vpow.pop %v1433
        %v1435 = vadd.f32 %v1434, 1.0
        %v1436 = vrcp.pop %v1435
        %v1437 = vmul.f32 1.0, %v1436
        %v1438 = vxor.u32 %v1429, 2147483648
        %v1439 = vmul.f32 %v1438, 1.442695
        %v1440 = vpow.pop %v1439
        %v1441 = vadd.f32 %v1440, 1.0
        %v1442 = vrcp.pop %v1441
        %v1443 = vmul.f32 1.0, %v1442
        %v1444 = vtanh.pop %v1430
        %v1445 = vxor.u32 %v1431, 2147483648
        %v1446 = vmul.f32 %v1445, 1.442695
        %v1447 = vpow.pop %v1446
        %v1448 = vadd.f32 %v1447, 1.0
        %v1449 = vrcp.pop %v1448
        %v1450 = vmul.f32 1.0, %v1449
        %v1452 = vrot.slane %v1268, 6
        %v1454 = vmul.f32 %v1443, %v1452
        %v1455 = vmul.f32 %v1437, %v1444
        %v1456 = vadd.f32 %v1454, %v1455
        %v1457 = vtanh.pop %v1456
        %v1458 = vmul.f32 %v1450, %v1457
        %v1460 = vrot.slane %v1458, 6
        %1462 = vmatprep.subr.mxu0 %v723
        %1463 = vmatpush1.msra.mxu0 %v722
        %1464 = vmatprep.subr.mxu0 %v719
        %1465 = vmatpush1.msra.mxu0 %v718
        %1466 = vmatprep.subr.mxu0 %v715
        %1467 = vmatpush1.msra.mxu0 %v714
        %1468 = vmatprep.subr.mxu0 %v711
        %1469 = vmatpush1.msra.mxu0 %v710
        %1470 = vmatprep.subr.mxu0 %v707
        %1471 = vmatpush1.msra.mxu0 %v706
        %1472 = vmatprep.subr.mxu0 %v703
        %1473 = vmatpush1.msra.mxu0 %v702
        %1474 = vmatprep.subr.mxu0 %v699
        %1475 = vmatpush1.msra.mxu0 %v698
        %1476 = vmatprep.subr.mxu0 %v695
        %1477 = vmatpush1.msra.mxu0 %v694
        %1478 = vmatprep.subr.mxu0 %v691
        %1479 = vmatpush1.msra.mxu0 %v690
        %1480 = vmatprep.subr.mxu0 %v687
        %1481 = vmatpush1.msra.mxu0 %v686
        %1482 = vmatprep.subr.mxu0 %v683
        %1483 = vmatpush1.msra.mxu0 %v682
        %1484 = vmatprep.subr.mxu0 %v679
        %1485 = vmatpush1.msra.mxu0 %v678
        %1486 = vmatprep.subr.mxu0 %v675
        %1487 = vmatpush1.msra.mxu0 %v674
        %1488 = vmatprep.subr.mxu0 %v671
        %1489 = vmatpush1.msra.mxu0 %v670
        %1490 = vmatprep.subr.mxu0 %v667
        %1491 = vmatpush1.msra.mxu0 %v666
        %1492 = vmatprep.subr.mxu0 %v663
        %1493 = vmatpush1.msra.mxu0 %v662
        %1494 = vmatprep.subr.mxu0 0.0
        %1495 = vmatpush2.msra.mxu0 0.0
        %1496 = vmatprep.subr.mxu0 0.0
        %1497 = vmatpush2.msra.mxu0 0.0
        %1498 = vmatprep.subr.mxu0 0.0
        %1499 = vmatpush2.msra.mxu0 0.0
        %1500 = vmatprep.subr.mxu0 0.0
        %1501 = vmatpush2.msra.mxu0 0.0
        %1502 = vmatprep.subr.mxu0 0.0
        %1503 = vmatpush2.msra.mxu0 0.0
        %1504 = vmatprep.subr.mxu0 0.0
        %1505 = vmatpush2.msra.mxu0 0.0
        %1506 = vmatprep.subr.mxu0 0.0
        %1507 = vmatpush2.msra.mxu0 0.0
        %1508 = vmatprep.subr.mxu0 0.0
        %1509 = vmatpush2.msra.mxu0 0.0
        %1510 = vmatprep.subr.mxu0 0.0
        %1511 = vmatpush2.msra.mxu0 0.0
        %1512 = vmatprep.subr.mxu0 0.0
        %1513 = vmatpush2.msra.mxu0 0.0
        %1514 = vmatprep.subr.mxu0 0.0
        %1515 = vmatpush2.msra.mxu0 0.0
        %1516 = vmatprep.subr.mxu0 0.0
        %1517 = vmatpush2.msra.mxu0 0.0
        %1518 = vmatprep.subr.mxu0 0.0
        %1519 = vmatpush2.msra.mxu0 0.0
        %1520 = vmatprep.subr.mxu0 0.0
        %1521 = vmatpush2.msra.mxu0 0.0
        %1522 = vmatprep.subr.mxu0 0.0
        %1523 = vmatpush2.msra.mxu0 0.0
        %1524 = vmatprep.subr.mxu0 0.0
        %1525 = vmatpush2.msra.mxu0 0.0
        %1526 = vmatprep.mubr.f32.mxu0 0.0
        %1527 = vmatmul.mubr.f32.gmra.mxu0 %v1460
        %v1528 = vpop.f32.mrf.mxu0
        %v1529 = vadd.f32 0.0, %v1528
        %v1530 = vpop.f32.mrf.mxu0
        %v1531 = vadd.f32 0.0, %v1530
        %1532 = vdwg.mxu0
        %1533 = vmatprep.subr.mxu0 %v725
        %1534 = vmatpush1.msra.mxu0 %v724
        %1535 = vmatprep.subr.mxu0 %v721
        %1536 = vmatpush1.msra.mxu0 %v720
        %1537 = vmatprep.subr.mxu0 %v717
        %1538 = vmatpush1.msra.mxu0 %v716
        %1539 = vmatprep.subr.mxu0 %v713
        %1540 = vmatpush1.msra.mxu0 %v712
        %1541 = vmatprep.subr.mxu0 %v709
        %1542 = vmatpush1.msra.mxu0 %v708
        %1543 = vmatprep.subr.mxu0 %v705
        %1544 = vmatpush1.msra.mxu0 %v704
        %1545 = vmatprep.subr.mxu0 %v701
        %1546 = vmatpush1.msra.mxu0 %v700
        %1547 = vmatprep.subr.mxu0 %v697
        %1548 = vmatpush1.msra.mxu0 %v696
        %1549 = vmatprep.subr.mxu0 %v693
        %1550 = vmatpush1.msra.mxu0 %v692
        %1551 = vmatprep.subr.mxu0 %v689
        %1552 = vmatpush1.msra.mxu0 %v688
        %1553 = vmatprep.subr.mxu0 %v685
        %1554 = vmatpush1.msra.mxu0 %v684
        %1555 = vmatprep.subr.mxu0 %v681
        %1556 = vmatpush1.msra.mxu0 %v680
        %1557 = vmatprep.subr.mxu0 %v677
        %1558 = vmatpush1.msra.mxu0 %v676
        %1559 = vmatprep.subr.mxu0 %v673
        %1560 = vmatpush1.msra.mxu0 %v672
        %1561 = vmatprep.subr.mxu0 %v669
        %1562 = vmatpush1.msra.mxu0 %v668
        %1563 = vmatprep.subr.mxu0 %v665
        %1564 = vmatpush1.msra.mxu0 %v664
        %1565 = vmatprep.subr.mxu0 0.0
        %1566 = vmatpush2.msra.mxu0 0.0
        %1567 = vmatprep.subr.mxu0 0.0
        %1568 = vmatpush2.msra.mxu0 0.0
        %1569 = vmatprep.subr.mxu0 0.0
        %1570 = vmatpush2.msra.mxu0 0.0
        %1571 = vmatprep.subr.mxu0 0.0
        %1572 = vmatpush2.msra.mxu0 0.0
        %1573 = vmatprep.subr.mxu0 0.0
        %1574 = vmatpush2.msra.mxu0 0.0
        %1575 = vmatprep.subr.mxu0 0.0
        %1576 = vmatpush2.msra.mxu0 0.0
        %1577 = vmatprep.subr.mxu0 0.0
        %1578 = vmatpush2.msra.mxu0 0.0
        %1579 = vmatprep.subr.mxu0 0.0
        %1580 = vmatpush2.msra.mxu0 0.0
        %1581 = vmatprep.subr.mxu0 0.0
        %1582 = vmatpush2.msra.mxu0 0.0
        %1583 = vmatprep.subr.mxu0 0.0
        %1584 = vmatpush2.msra.mxu0 0.0
        %1585 = vmatprep.subr.mxu0 0.0
        %1586 = vmatpush2.msra.mxu0 0.0
        %1587 = vmatprep.subr.mxu0 0.0
        %1588 = vmatpush2.msra.mxu0 0.0
        %1589 = vmatprep.subr.mxu0 0.0
        %1590 = vmatpush2.msra.mxu0 0.0
        %1591 = vmatprep.subr.mxu0 0.0
        %1592 = vmatpush2.msra.mxu0 0.0
        %1593 = vmatprep.subr.mxu0 0.0
        %1594 = vmatpush2.msra.mxu0 0.0
        %1595 = vmatprep.subr.mxu0 0.0
        %1596 = vmatpush2.msra.mxu0 0.0
        %1597 = vmatprep.mubr.f32.mxu0 0.0
        %1598 = vmatmul.mubr.f32.gmra.mxu0 %v1460
        %v1599 = vpop.f32.mrf.mxu0
        %v1600 = vadd.f32 0.0, %v1599
        %v1601 = vpop.f32.mrf.mxu0
        %v1602 = vadd.f32 0.0, %v1601
        %1603 = vdwg.mxu0
        %v1604 = vadd.f32 %v581, %v1529
        %v1605 = vadd.f32 %v583, %v1531
        %v1606 = vadd.f32 %v658, %v1600
        %v1607 = vadd.f32 %v660, %v1602
        %v1608 = vxor.u32 %v1604, 2147483648
        %v1609 = vmul.f32 %v1608, 1.442695
        %v1610 = vpow.pop %v1609
        %v1611 = vadd.f32 %v1610, 1.0
        %v1612 = vrcp.pop %v1611
        %v1613 = vmul.f32 1.0, %v1612
        %v1614 = vxor.u32 %v1605, 2147483648
        %v1615 = vmul.f32 %v1614, 1.442695
        %v1616 = vpow.pop %v1615
        %v1617 = vadd.f32 %v1616, 1.0
        %v1618 = vrcp.pop %v1617
        %v1619 = vmul.f32 1.0, %v1618
        %v1620 = vtanh.pop %v1606
        %v1621 = vxor.u32 %v1607, 2147483648
        %v1622 = vmul.f32 %v1621, 1.442695
        %v1623 = vpow.pop %v1622
        %v1624 = vadd.f32 %v1623, 1.0
        %v1625 = vrcp.pop %v1624
        %v1626 = vmul.f32 1.0, %v1625
        %v1628 = vrot.slane %v1456, 6
        %v1630 = vmul.f32 %v1619, %v1628
        %v1631 = vmul.f32 %v1613, %v1620
        %v1632 = vadd.f32 %v1630, %v1631
        %v1633 = vtanh.pop %v1632
        %v1634 = vmul.f32 %v1626, %v1633
        %1635 = vmatprep.subr.mxu0 %v723
        %1636 = vmatpush1.msra.mxu0 %v722
        %1637 = vmatprep.subr.mxu0 %v719
        %1638 = vmatpush1.msra.mxu0 %v718
        %1639 = vmatprep.subr.mxu0 %v715
        %1640 = vmatpush1.msra.mxu0 %v714
        %1641 = vmatprep.subr.mxu0 %v711
        %1642 = vmatpush1.msra.mxu0 %v710
        %1643 = vmatprep.subr.mxu0 %v707
        %1644 = vmatpush1.msra.mxu0 %v706
        %1645 = vmatprep.subr.mxu0 %v703
        %1646 = vmatpush1.msra.mxu0 %v702
        %1647 = vmatprep.subr.mxu0 %v699
        %1648 = vmatpush1.msra.mxu0 %v698
        %1649 = vmatprep.subr.mxu0 %v695
        %1650 = vmatpush1.msra.mxu0 %v694
        %1651 = vmatprep.subr.mxu0 %v691
        %1652 = vmatpush1.msra.mxu0 %v690
        %1653 = vmatprep.subr.mxu0 %v687
        %1654 = vmatpush1.msra.mxu0 %v686
        %1655 = vmatprep.subr.mxu0 %v683
        %1656 = vmatpush1.msra.mxu0 %v682
        %1657 = vmatprep.subr.mxu0 %v679
        %1658 = vmatpush1.msra.mxu0 %v678
        %1659 = vmatprep.subr.mxu0 %v675
        %1660 = vmatpush1.msra.mxu0 %v674
        %1661 = vmatprep.subr.mxu0 %v671
        %1662 = vmatpush1.msra.mxu0 %v670
        %1663 = vmatprep.subr.mxu0 %v667
        %1664 = vmatpush1.msra.mxu0 %v666
        %1665 = vmatprep.subr.mxu0 %v663
        %1666 = vmatpush1.msra.mxu0 %v662
        %1667 = vmatprep.subr.mxu0 0.0
        %1668 = vmatpush2.msra.mxu0 0.0
        %1669 = vmatprep.subr.mxu0 0.0
        %1670 = vmatpush2.msra.mxu0 0.0
        %1671 = vmatprep.subr.mxu0 0.0
        %1672 = vmatpush2.msra.mxu0 0.0
        %1673 = vmatprep.subr.mxu0 0.0
        %1674 = vmatpush2.msra.mxu0 0.0
        %1675 = vmatprep.subr.mxu0 0.0
        %1676 = vmatpush2.msra.mxu0 0.0
        %1677 = vmatprep.subr.mxu0 0.0
        %1678 = vmatpush2.msra.mxu0 0.0
        %1679 = vmatprep.subr.mxu0 0.0
        %1680 = vmatpush2.msra.mxu0 0.0
        %1681 = vmatprep.subr.mxu0 0.0
        %1682 = vmatpush2.msra.mxu0 0.0
        %1683 = vmatprep.subr.mxu0 0.0
        %1684 = vmatpush2.msra.mxu0 0.0
        %1685 = vmatprep.subr.mxu0 0.0
        %1686 = vmatpush2.msra.mxu0 0.0
        %1687 = vmatprep.subr.mxu0 0.0
        %1688 = vmatpush2.msra.mxu0 0.0
        %1689 = vmatprep.subr.mxu0 0.0
        %1690 = vmatpush2.msra.mxu0 0.0
        %1691 = vmatprep.subr.mxu0 0.0
        %1692 = vmatpush2.msra.mxu0 0.0
        %1693 = vmatprep.subr.mxu0 0.0
        %1694 = vmatpush2.msra.mxu0 0.0
        %1695 = vmatprep.subr.mxu0 0.0
        %1696 = vmatpush2.msra.mxu0 0.0
        %1697 = vmatprep.subr.mxu0 0.0
        %1698 = vmatpush2.msra.mxu0 0.0
        %1699 = vmatprep.mubr.f32.mxu0 0.0
        %1700 = vmatmul.mubr.f32.gmra.mxu0 %v1634
        %v1701 = vpop.f32.mrf.mxu0
        %v1702 = vadd.f32 0.0, %v1701
        %v1703 = vpop.f32.mrf.mxu0
        %v1704 = vadd.f32 0.0, %v1703
        %1705 = vdwg.mxu0
        %1706 = vmatprep.subr.mxu0 %v725
        %1707 = vmatpush1.msra.mxu0 %v724
        %1708 = vmatprep.subr.mxu0 %v721
        %1709 = vmatpush1.msra.mxu0 %v720
        %1710 = vmatprep.subr.mxu0 %v717
        %1711 = vmatpush1.msra.mxu0 %v716
        %1712 = vmatprep.subr.mxu0 %v713
        %1713 = vmatpush1.msra.mxu0 %v712
        %1714 = vmatprep.subr.mxu0 %v709
        %1715 = vmatpush1.msra.mxu0 %v708
        %1716 = vmatprep.subr.mxu0 %v705
        %1717 = vmatpush1.msra.mxu0 %v704
        %1718 = vmatprep.subr.mxu0 %v701
        %1719 = vmatpush1.msra.mxu0 %v700
        %1720 = vmatprep.subr.mxu0 %v697
        %1721 = vmatpush1.msra.mxu0 %v696
        %1722 = vmatprep.subr.mxu0 %v693
        %1723 = vmatpush1.msra.mxu0 %v692
        %1724 = vmatprep.subr.mxu0 %v689
        %1725 = vmatpush1.msra.mxu0 %v688
        %1726 = vmatprep.subr.mxu0 %v685
        %1727 = vmatpush1.msra.mxu0 %v684
        %1728 = vmatprep.subr.mxu0 %v681
        %1729 = vmatpush1.msra.mxu0 %v680
        %1730 = vmatprep.subr.mxu0 %v677
        %1731 = vmatpush1.msra.mxu0 %v676
        %1732 = vmatprep.subr.mxu0 %v673
        %1733 = vmatpush1.msra.mxu0 %v672
        %1734 = vmatprep.subr.mxu0 %v669
        %1735 = vmatpush1.msra.mxu0 %v668
        %1736 = vmatprep.subr.mxu0 %v665
        %1737 = vmatpush1.msra.mxu0 %v664
        %1738 = vmatprep.subr.mxu0 0.0
        %1739 = vmatpush2.msra.mxu0 0.0
        %1740 = vmatprep.subr.mxu0 0.0
        %1741 = vmatpush2.msra.mxu0 0.0
        %1742 = vmatprep.subr.mxu0 0.0
        %1743 = vmatpush2.msra.mxu0 0.0
        %1744 = vmatprep.subr.mxu0 0.0
        %1745 = vmatpush2.msra.mxu0 0.0
        %1746 = vmatprep.subr.mxu0 0.0
        %1747 = vmatpush2.msra.mxu0 0.0
        %1748 = vmatprep.subr.mxu0 0.0
        %1749 = vmatpush2.msra.mxu0 0.0
        %1750 = vmatprep.subr.mxu0 0.0
        %1751 = vmatpush2.msra.mxu0 0.0
        %1752 = vmatprep.subr.mxu0 0.0
        %1753 = vmatpush2.msra.mxu0 0.0
        %1754 = vmatprep.subr.mxu0 0.0
        %1755 = vmatpush2.msra.mxu0 0.0
        %1756 = vmatprep.subr.mxu0 0.0
        %1757 = vmatpush2.msra.mxu0 0.0
        %1758 = vmatprep.subr.mxu0 0.0
        %1759 = vmatpush2.msra.mxu0 0.0
        %1760 = vmatprep.subr.mxu0 0.0
        %1761 = vmatpush2.msra.mxu0 0.0
        %1762 = vmatprep.subr.mxu0 0.0
        %1763 = vmatpush2.msra.mxu0 0.0
        %1764 = vmatprep.subr.mxu0 0.0
        %1765 = vmatpush2.msra.mxu0 0.0
        %1766 = vmatprep.subr.mxu0 0.0
        %1767 = vmatpush2.msra.mxu0 0.0
        %1768 = vmatprep.subr.mxu0 0.0
        %1769 = vmatpush2.msra.mxu0 0.0
        %1770 = vmatprep.mubr.f32.mxu0 0.0
        %1771 = vmatmul.mubr.f32.gmra.mxu0 %v1634
        %v1772 = vpop.f32.mrf.mxu0
        %v1773 = vadd.f32 0.0, %v1772
        %v1774 = vpop.f32.mrf.mxu0
        %v1775 = vadd.f32 0.0, %v1774
        %1776 = vdwg.mxu0
        %v1781 = vrot.slane %v1702, 6
        %v1782 = vrot.slane %v1704, 6
        %v1783 = vrot.slane %v1773, 6
        %v1784 = vrot.slane %v1775, 6
        %v1789 = vadd.f32 %v581, %v1781
        %v1790 = vadd.f32 %v583, %v1782
        %v1791 = vadd.f32 %v658, %v1783
        %v1792 = vadd.f32 %v660, %v1784
        %v1793 = vxor.u32 %v1789, 2147483648
        %v1794 = vmul.f32 %v1793, 1.442695
        %v1795 = vpow.pop %v1794
        %v1796 = vadd.f32 %v1795, 1.0
        %v1797 = vrcp.pop %v1796
        %v1798 = vmul.f32 1.0, %v1797
        %v1799 = vxor.u32 %v1790, 2147483648
        %v1800 = vmul.f32 %v1799, 1.442695
        %v1801 = vpow.pop %v1800
        %v1802 = vadd.f32 %v1801, 1.0
        %v1803 = vrcp.pop %v1802
        %v1804 = vmul.f32 1.0, %v1803
        %v1805 = vtanh.pop %v1791
        %v1806 = vxor.u32 %v1792, 2147483648
        %v1807 = vmul.f32 %v1806, 1.442695
        %v1808 = vpow.pop %v1807
        %v1809 = vadd.f32 %v1808, 1.0
        %v1810 = vrcp.pop %v1809
        %v1811 = vmul.f32 1.0, %v1810
        %v1813 = vrot.slane %v1632, 6
        %v1815 = vmul.f32 %v1804, %v1813
        %v1816 = vmul.f32 %v1798, %v1805
        %v1817 = vadd.f32 %v1815, %v1816
        %v1818 = vtanh.pop %v1817
        %v1819 = vmul.f32 %v1811, %v1818
        %v1821 = vrot.slane %v1819, 2
        %1823 = vmatprep.subr.mxu0 %v723
        %1824 = vmatpush1.msra.mxu0 %v722
        %1825 = vmatprep.subr.mxu0 %v719
        %1826 = vmatpush1.msra.mxu0 %v718
        %1827 = vmatprep.subr.mxu0 %v715
        %1828 = vmatpush1.msra.mxu0 %v714
        %1829 = vmatprep.subr.mxu0 %v711
        %1830 = vmatpush1.msra.mxu0 %v710
        %1831 = vmatprep.subr.mxu0 %v707
        %1832 = vmatpush1.msra.mxu0 %v706
        %1833 = vmatprep.subr.mxu0 %v703
        %1834 = vmatpush1.msra.mxu0 %v702
        %1835 = vmatprep.subr.mxu0 %v699
        %1836 = vmatpush1.msra.mxu0 %v698
        %1837 = vmatprep.subr.mxu0 %v695
        %1838 = vmatpush1.msra.mxu0 %v694
        %1839 = vmatprep.subr.mxu0 %v691
        %1840 = vmatpush1.msra.mxu0 %v690
        %1841 = vmatprep.subr.mxu0 %v687
        %1842 = vmatpush1.msra.mxu0 %v686
        %1843 = vmatprep.subr.mxu0 %v683
        %1844 = vmatpush1.msra.mxu0 %v682
        %1845 = vmatprep.subr.mxu0 %v679
        %1846 = vmatpush1.msra.mxu0 %v678
        %1847 = vmatprep.subr.mxu0 %v675
        %1848 = vmatpush1.msra.mxu0 %v674
        %1849 = vmatprep.subr.mxu0 %v671
        %1850 = vmatpush1.msra.mxu0 %v670
        %1851 = vmatprep.subr.mxu0 %v667
        %1852 = vmatpush1.msra.mxu0 %v666
        %1853 = vmatprep.subr.mxu0 %v663
        %1854 = vmatpush1.msra.mxu0 %v662
        %1855 = vmatprep.subr.mxu0 0.0
        %1856 = vmatpush2.msra.mxu0 0.0
        %1857 = vmatprep.subr.mxu0 0.0
        %1858 = vmatpush2.msra.mxu0 0.0
        %1859 = vmatprep.subr.mxu0 0.0
        %1860 = vmatpush2.msra.mxu0 0.0
        %1861 = vmatprep.subr.mxu0 0.0
        %1862 = vmatpush2.msra.mxu0 0.0
        %1863 = vmatprep.subr.mxu0 0.0
        %1864 = vmatpush2.msra.mxu0 0.0
        %1865 = vmatprep.subr.mxu0 0.0
        %1866 = vmatpush2.msra.mxu0 0.0
        %1867 = vmatprep.subr.mxu0 0.0
        %1868 = vmatpush2.msra.mxu0 0.0
        %1869 = vmatprep.subr.mxu0 0.0
        %1870 = vmatpush2.msra.mxu0 0.0
        %1871 = vmatprep.subr.mxu0 0.0
        %1872 = vmatpush2.msra.mxu0 0.0
        %1873 = vmatprep.subr.mxu0 0.0
        %1874 = vmatpush2.msra.mxu0 0.0
        %1875 = vmatprep.subr.mxu0 0.0
        %1876 = vmatpush2.msra.mxu0 0.0
        %1877 = vmatprep.subr.mxu0 0.0
        %1878 = vmatpush2.msra.mxu0 0.0
        %1879 = vmatprep.subr.mxu0 0.0
        %1880 = vmatpush2.msra.mxu0 0.0
        %1881 = vmatprep.subr.mxu0 0.0
        %1882 = vmatpush2.msra.mxu0 0.0
        %1883 = vmatprep.subr.mxu0 0.0
        %1884 = vmatpush2.msra.mxu0 0.0
        %1885 = vmatprep.subr.mxu0 0.0
        %1886 = vmatpush2.msra.mxu0 0.0
        %1887 = vmatprep.mubr.f32.mxu0 0.0
        %1888 = vmatmul.mubr.f32.gmra.mxu0 %v1821
        %v1889 = vpop.f32.mrf.mxu0
        %v1890 = vadd.f32 0.0, %v1889
        %v1891 = vpop.f32.mrf.mxu0
        %v1892 = vadd.f32 0.0, %v1891
        %1893 = vdwg.mxu0
        %1894 = vmatprep.subr.mxu0 %v725
        %1895 = vmatpush1.msra.mxu0 %v724
        %1896 = vmatprep.subr.mxu0 %v721
        %1897 = vmatpush1.msra.mxu0 %v720
        %1898 = vmatprep.subr.mxu0 %v717
        %1899 = vmatpush1.msra.mxu0 %v716
        %1900 = vmatprep.subr.mxu0 %v713
        %1901 = vmatpush1.msra.mxu0 %v712
        %1902 = vmatprep.subr.mxu0 %v709
        %1903 = vmatpush1.msra.mxu0 %v708
        %1904 = vmatprep.subr.mxu0 %v705
        %1905 = vmatpush1.msra.mxu0 %v704
        %1906 = vmatprep.subr.mxu0 %v701
        %1907 = vmatpush1.msra.mxu0 %v700
        %1908 = vmatprep.subr.mxu0 %v697
        %1909 = vmatpush1.msra.mxu0 %v696
        %1910 = vmatprep.subr.mxu0 %v693
        %1911 = vmatpush1.msra.mxu0 %v692
        %1912 = vmatprep.subr.mxu0 %v689
        %1913 = vmatpush1.msra.mxu0 %v688
        %1914 = vmatprep.subr.mxu0 %v685
        %1915 = vmatpush1.msra.mxu0 %v684
        %1916 = vmatprep.subr.mxu0 %v681
        %1917 = vmatpush1.msra.mxu0 %v680
        %1918 = vmatprep.subr.mxu0 %v677
        %1919 = vmatpush1.msra.mxu0 %v676
        %1920 = vmatprep.subr.mxu0 %v673
        %1921 = vmatpush1.msra.mxu0 %v672
        %1922 = vmatprep.subr.mxu0 %v669
        %1923 = vmatpush1.msra.mxu0 %v668
        %1924 = vmatprep.subr.mxu0 %v665
        %1925 = vmatpush1.msra.mxu0 %v664
        %1926 = vmatprep.subr.mxu0 0.0
        %1927 = vmatpush2.msra.mxu0 0.0
        %1928 = vmatprep.subr.mxu0 0.0
        %1929 = vmatpush2.msra.mxu0 0.0
        %1930 = vmatprep.subr.mxu0 0.0
        %1931 = vmatpush2.msra.mxu0 0.0
        %1932 = vmatprep.subr.mxu0 0.0
        %1933 = vmatpush2.msra.mxu0 0.0
        %1934 = vmatprep.subr.mxu0 0.0
        %1935 = vmatpush2.msra.mxu0 0.0
        %1936 = vmatprep.subr.mxu0 0.0
        %1937 = vmatpush2.msra.mxu0 0.0
        %1938 = vmatprep.subr.mxu0 0.0
        %1939 = vmatpush2.msra.mxu0 0.0
        %1940 = vmatprep.subr.mxu0 0.0
        %1941 = vmatpush2.msra.mxu0 0.0
        %1942 = vmatprep.subr.mxu0 0.0
        %1943 = vmatpush2.msra.mxu0 0.0
        %1944 = vmatprep.subr.mxu0 0.0
        %1945 = vmatpush2.msra.mxu0 0.0
        %1946 = vmatprep.subr.mxu0 0.0
        %1947 = vmatpush2.msra.mxu0 0.0
        %1948 = vmatprep.subr.mxu0 0.0
        %1949 = vmatpush2.msra.mxu0 0.0
        %1950 = vmatprep.subr.mxu0 0.0
        %1951 = vmatpush2.msra.mxu0 0.0
        %1952 = vmatprep.subr.mxu0 0.0
        %1953 = vmatpush2.msra.mxu0 0.0
        %1954 = vmatprep.subr.mxu0 0.0
        %1955 = vmatpush2.msra.mxu0 0.0
        %1956 = vmatprep.subr.mxu0 0.0
        %1957 = vmatpush2.msra.mxu0 0.0
        %1958 = vmatprep.mubr.f32.mxu0 0.0
        %1959 = vmatmul.mubr.f32.gmra.mxu0 %v1821
        %v1960 = vpop.f32.mrf.mxu0
        %v1961 = vadd.f32 0.0, %v1960
        %v1962 = vpop.f32.mrf.mxu0
        %v1963 = vadd.f32 0.0, %v1962
        %1964 = vdwg.mxu0
        %v1969 = vrot.slane %v1890, 4
        %v1970 = vrot.slane %v1892, 4
        %v1971 = vrot.slane %v1961, 4
        %v1972 = vrot.slane %v1963, 4
        %v1977 = vadd.f32 %v581, %v1969
        %v1978 = vadd.f32 %v583, %v1970
        %v1979 = vadd.f32 %v658, %v1971
        %v1980 = vadd.f32 %v660, %v1972
        %v1981 = vxor.u32 %v1977, 2147483648
        %v1982 = vmul.f32 %v1981, 1.442695
        %v1983 = vpow.pop %v1982
        %v1984 = vadd.f32 %v1983, 1.0
        %v1985 = vrcp.pop %v1984
        %v1986 = vmul.f32 1.0, %v1985
        %v1987 = vxor.u32 %v1978, 2147483648
        %v1988 = vmul.f32 %v1987, 1.442695
        %v1989 = vpow.pop %v1988
        %v1990 = vadd.f32 %v1989, 1.0
        %v1991 = vrcp.pop %v1990
        %v1992 = vmul.f32 1.0, %v1991
        %v1993 = vtanh.pop %v1979
        %v1994 = vxor.u32 %v1980, 2147483648
        %v1995 = vmul.f32 %v1994, 1.442695
        %v1996 = vpow.pop %v1995
        %v1997 = vadd.f32 %v1996, 1.0
        %v1998 = vrcp.pop %v1997
        %v1999 = vmul.f32 1.0, %v1998
        %v2001 = vrot.slane %v1817, 6
        %v2003 = vmul.f32 %v1992, %v2001
        %v2004 = vmul.f32 %v1986, %v1993
        %v2005 = vadd.f32 %v2003, %v2004
        %v2006 = vtanh.pop %v2005
        %v2007 = vmul.f32 %v1999, %v2006
        %v2009 = vrot.slane %v2007, 4
        %2011 = vmatprep.subr.mxu0 %v723
        %2012 = vmatpush1.msra.mxu0 %v722
        %2013 = vmatprep.subr.mxu0 %v719
        %2014 = vmatpush1.msra.mxu0 %v718
        %2015 = vmatprep.subr.mxu0 %v715
        %2016 = vmatpush1.msra.mxu0 %v714
        %2017 = vmatprep.subr.mxu0 %v711
        %2018 = vmatpush1.msra.mxu0 %v710
        %2019 = vmatprep.subr.mxu0 %v707
        %2020 = vmatpush1.msra.mxu0 %v706
        %2021 = vmatprep.subr.mxu0 %v703
        %2022 = vmatpush1.msra.mxu0 %v702
        %2023 = vmatprep.subr.mxu0 %v699
        %2024 = vmatpush1.msra.mxu0 %v698
        %2025 = vmatprep.subr.mxu0 %v695
        %2026 = vmatpush1.msra.mxu0 %v694
        %2027 = vmatprep.subr.mxu0 %v691
        %2028 = vmatpush1.msra.mxu0 %v690
        %2029 = vmatprep.subr.mxu0 %v687
        %2030 = vmatpush1.msra.mxu0 %v686
        %2031 = vmatprep.subr.mxu0 %v683
        %2032 = vmatpush1.msra.mxu0 %v682
        %2033 = vmatprep.subr.mxu0 %v679
        %2034 = vmatpush1.msra.mxu0 %v678
        %2035 = vmatprep.subr.mxu0 %v675
        %2036 = vmatpush1.msra.mxu0 %v674
        %2037 = vmatprep.subr.mxu0 %v671
        %2038 = vmatpush1.msra.mxu0 %v670
        %2039 = vmatprep.subr.mxu0 %v667
        %2040 = vmatpush1.msra.mxu0 %v666
        %2041 = vmatprep.subr.mxu0 %v663
        %2042 = vmatpush1.msra.mxu0 %v662
        %2043 = vmatprep.subr.mxu0 0.0
        %2044 = vmatpush2.msra.mxu0 0.0
        %2045 = vmatprep.subr.mxu0 0.0
        %2046 = vmatpush2.msra.mxu0 0.0
        %2047 = vmatprep.subr.mxu0 0.0
        %2048 = vmatpush2.msra.mxu0 0.0
        %2049 = vmatprep.subr.mxu0 0.0
        %2050 = vmatpush2.msra.mxu0 0.0
        %2051 = vmatprep.subr.mxu0 0.0
        %2052 = vmatpush2.msra.mxu0 0.0
        %2053 = vmatprep.subr.mxu0 0.0
        %2054 = vmatpush2.msra.mxu0 0.0
        %2055 = vmatprep.subr.mxu0 0.0
        %2056 = vmatpush2.msra.mxu0 0.0
        %2057 = vmatprep.subr.mxu0 0.0
        %2058 = vmatpush2.msra.mxu0 0.0
        %2059 = vmatprep.subr.mxu0 0.0
        %2060 = vmatpush2.msra.mxu0 0.0
        %2061 = vmatprep.subr.mxu0 0.0
        %2062 = vmatpush2.msra.mxu0 0.0
        %2063 = vmatprep.subr.mxu0 0.0
        %2064 = vmatpush2.msra.mxu0 0.0
        %2065 = vmatprep.subr.mxu0 0.0
        %2066 = vmatpush2.msra.mxu0 0.0
        %2067 = vmatprep.subr.mxu0 0.0
        %2068 = vmatpush2.msra.mxu0 0.0
        %2069 = vmatprep.subr.mxu0 0.0
        %2070 = vmatpush2.msra.mxu0 0.0
        %2071 = vmatprep.subr.mxu0 0.0
        %2072 = vmatpush2.msra.mxu0 0.0
        %2073 = vmatprep.subr.mxu0 0.0
        %2074 = vmatpush2.msra.mxu0 0.0
        %2075 = vmatprep.mubr.f32.mxu0 0.0
        %2076 = vmatmul.mubr.f32.gmra.mxu0 %v2009
        %v2077 = vpop.f32.mrf.mxu0
        %v2078 = vadd.f32 0.0, %v2077
        %v2079 = vpop.f32.mrf.mxu0
        %v2080 = vadd.f32 0.0, %v2079
        %2081 = vdwg.mxu0
        %2082 = vmatprep.subr.mxu0 %v725
        %2083 = vmatpush1.msra.mxu0 %v724
        %2084 = vmatprep.subr.mxu0 %v721
        %2085 = vmatpush1.msra.mxu0 %v720
        %2086 = vmatprep.subr.mxu0 %v717
        %2087 = vmatpush1.msra.mxu0 %v716
        %2088 = vmatprep.subr.mxu0 %v713
        %2089 = vmatpush1.msra.mxu0 %v712
        %2090 = vmatprep.subr.mxu0 %v709
        %2091 = vmatpush1.msra.mxu0 %v708
        %2092 = vmatprep.subr.mxu0 %v705
        %2093 = vmatpush1.msra.mxu0 %v704
        %2094 = vmatprep.subr.mxu0 %v701
        %2095 = vmatpush1.msra.mxu0 %v700
        %2096 = vmatprep.subr.mxu0 %v697
        %2097 = vmatpush1.msra.mxu0 %v696
        %2098 = vmatprep.subr.mxu0 %v693
        %2099 = vmatpush1.msra.mxu0 %v692
        %2100 = vmatprep.subr.mxu0 %v689
        %2101 = vmatpush1.msra.mxu0 %v688
        %2102 = vmatprep.subr.mxu0 %v685
        %2103 = vmatpush1.msra.mxu0 %v684
        %2104 = vmatprep.subr.mxu0 %v681
        %2105 = vmatpush1.msra.mxu0 %v680
        %2106 = vmatprep.subr.mxu0 %v677
        %2107 = vmatpush1.msra.mxu0 %v676
        %2108 = vmatprep.subr.mxu0 %v673
        %2109 = vmatpush1.msra.mxu0 %v672
        %2110 = vmatprep.subr.mxu0 %v669
        %2111 = vmatpush1.msra.mxu0 %v668
        %2112 = vmatprep.subr.mxu0 %v665
        %2113 = vmatpush1.msra.mxu0 %v664
        %2114 = vmatprep.subr.mxu0 0.0
        %2115 = vmatpush2.msra.mxu0 0.0
        %2116 = vmatprep.subr.mxu0 0.0
        %2117 = vmatpush2.msra.mxu0 0.0
        %2118 = vmatprep.subr.mxu0 0.0
        %2119 = vmatpush2.msra.mxu0 0.0
        %2120 = vmatprep.subr.mxu0 0.0
        %2121 = vmatpush2.msra.mxu0 0.0
        %2122 = vmatprep.subr.mxu0 0.0
        %2123 = vmatpush2.msra.mxu0 0.0
        %2124 = vmatprep.subr.mxu0 0.0
        %2125 = vmatpush2.msra.mxu0 0.0
        %2126 = vmatprep.subr.mxu0 0.0
        %2127 = vmatpush2.msra.mxu0 0.0
        %2128 = vmatprep.subr.mxu0 0.0
        %2129 = vmatpush2.msra.mxu0 0.0
        %2130 = vmatprep.subr.mxu0 0.0
        %2131 = vmatpush2.msra.mxu0 0.0
        %2132 = vmatprep.subr.mxu0 0.0
        %2133 = vmatpush2.msra.mxu0 0.0
        %2134 = vmatprep.subr.mxu0 0.0
        %2135 = vmatpush2.msra.mxu0 0.0
        %2136 = vmatprep.subr.mxu0 0.0
        %2137 = vmatpush2.msra.mxu0 0.0
        %2138 = vmatprep.subr.mxu0 0.0
        %2139 = vmatpush2.msra.mxu0 0.0
        %2140 = vmatprep.subr.mxu0 0.0
        %2141 = vmatpush2.msra.mxu0 0.0
        %2142 = vmatprep.subr.mxu0 0.0
        %2143 = vmatpush2.msra.mxu0 0.0
        %2144 = vmatprep.subr.mxu0 0.0
        %2145 = vmatpush2.msra.mxu0 0.0
        %2146 = vmatprep.mubr.f32.mxu0 0.0
        %2147 = vmatmul.mubr.f32.gmra.mxu0 %v2009
        %v2148 = vpop.f32.mrf.mxu0
        %v2149 = vadd.f32 0.0, %v2148
        %v2150 = vpop.f32.mrf.mxu0
        %v2151 = vadd.f32 0.0, %v2150
        %2152 = vdwg.mxu0
        %v2157 = vrot.slane %v2078, 2
        %v2158 = vrot.slane %v2080, 2
        %v2159 = vrot.slane %v2149, 2
        %v2160 = vrot.slane %v2151, 2
        %v2165 = vadd.f32 %v581, %v2157
        %v2166 = vadd.f32 %v583, %v2158
        %v2167 = vadd.f32 %v658, %v2159
        %v2168 = vadd.f32 %v660, %v2160
        %v2169 = vxor.u32 %v2165, 2147483648
        %v2170 = vmul.f32 %v2169, 1.442695
        %v2171 = vpow.pop %v2170
        %v2172 = vadd.f32 %v2171, 1.0
        %v2173 = vrcp.pop %v2172
        %v2174 = vmul.f32 1.0, %v2173
        %v2175 = vxor.u32 %v2166, 2147483648
        %v2176 = vmul.f32 %v2175, 1.442695
        %v2177 = vpow.pop %v2176
        %v2178 = vadd.f32 %v2177, 1.0
        %v2179 = vrcp.pop %v2178
        %v2180 = vmul.f32 1.0, %v2179
        %v2181 = vtanh.pop %v2167
        %v2182 = vxor.u32 %v2168, 2147483648
        %v2183 = vmul.f32 %v2182, 1.442695
        %v2184 = vpow.pop %v2183
        %v2185 = vadd.f32 %v2184, 1.0
        %v2186 = vrcp.pop %v2185
        %v2187 = vmul.f32 1.0, %v2186
        %v2189 = vrot.slane %v2005, 6
        %v2191 = vmul.f32 %v2180, %v2189
        %v2192 = vmul.f32 %v2174, %v2181
        %v2193 = vadd.f32 %v2191, %v2192
        %v2194 = vtanh.pop %v2193
        %v2195 = vmul.f32 %v2187, %v2194
        %2196 = vst [vmem:[#allocation11 - $0x6] sm:$0xc0] %v2195
        %2197 = vst [vmem:[#allocation13 - $0x6] sm:$0xc0] %v2193
        %v2199 = vrot.slane %v2195, 6
        %v2201 = vxor.u32 %v897, 2147483648
        %v2202 = vxor.u32 %v1084, 2147483648
        %v2203 = vxor.u32 %v1272, 2147483648
        %v2204 = vxor.u32 %v1460, 2147483648
        %v2205 = vxor.u32 %v1634, 2147483648
        %v2206 = vxor.u32 %v1821, 2147483648
        %v2207 = vxor.u32 %v2009, 2147483648
        %v2208 = vxor.u32 %v2199, 2147483648
        %v2209 = vmul.f32 %v2201, 1.442695
        %v2210 = vpow.pop %v2209
        %v2211 = vmul.f32 %v2202, 1.442695
        %v2212 = vpow.pop %v2211
        %v2213 = vmul.f32 %v2203, 1.442695
        %v2214 = vpow.pop %v2213
        %v2215 = vmul.f32 %v2204, 1.442695
        %v2216 = vpow.pop %v2215
        %v2217 = vmul.f32 %v2205, 1.442695
        %v2218 = vpow.pop %v2217
        %v2219 = vmul.f32 %v2206, 1.442695
        %v2220 = vpow.pop %v2219
        %v2221 = vmul.f32 %v2207, 1.442695
        %v2222 = vpow.pop %v2221
        %v2223 = vmul.f32 %v2208, 1.442695
        %v2224 = vpow.pop %v2223
        %v2225 = vadd.f32 %v2210, 1.0
        %v2226 = vadd.f32 %v2212, 1.0
        %v2227 = vadd.f32 %v2214, 1.0
        %v2228 = vadd.f32 %v2216, 1.0
        %v2229 = vadd.f32 %v2218, 1.0
        %v2230 = vadd.f32 %v2220, 1.0
        %v2231 = vadd.f32 %v2222, 1.0
        %v2232 = vadd.f32 %v2224, 1.0
        %v2233 = vrcp.pop %v2225
        %v2234 = vmul.f32 1.0, %v2233
        %v2235 = vrcp.pop %v2226
        %v2236 = vmul.f32 1.0, %v2235
        %v2237 = vrcp.pop %v2227
        %v2238 = vmul.f32 1.0, %v2237
        %v2239 = vrcp.pop %v2228
        %v2240 = vmul.f32 1.0, %v2239
        %v2241 = vrcp.pop %v2229
        %v2242 = vmul.f32 1.0, %v2241
        %v2243 = vrcp.pop %v2230
        %v2244 = vmul.f32 1.0, %v2243
        %v2245 = vrcp.pop %v2231
        %v2246 = vmul.f32 1.0, %v2245
        %v2247 = vrcp.pop %v2232
        %v2248 = vmul.f32 1.0, %v2247
        %v2249 = vround.ne.pseudo %v2234
        %v2250 = vround.ne.pseudo %v2236
        %v2251 = vround.ne.pseudo %v2238
        %v2252 = vround.ne.pseudo %v2240
        %v2253 = vround.ne.pseudo %v2242
        %v2254 = vround.ne.pseudo %v2244
        %v2255 = vround.ne.pseudo %v2246
        %v2256 = vround.ne.pseudo %v2248
        %v2257 = vpack.c.bf16 %v2249, %v2249
        %v2258 = vpack.c.bf16 %v2250, %v2250
        %v2259 = vpack.c.bf16 %v2251, %v2251
        %v2260 = vpack.c.bf16 %v2252, %v2252
        %v2261 = vpack.c.bf16 %v2253, %v2253
        %v2262 = vpack.c.bf16 %v2254, %v2254
        %v2263 = vpack.c.bf16 %v2255, %v2255
        %v2264 = vpack.c.bf16 %v2256, %v2256
        %v2273 = vcombine.low %v2257, %v2258
        %v2274 = vcombine.low %v2259, %v2260
        %v2275 = vcombine.low %v2261, %v2262
        %v2276 = vcombine.low %v2263, %v2264
        %v2278 = vunpack.c.l.s4 1966171168
        %v2279 = vunpack.c.0.s8 %v2278
        %v2280 = vlaneseq
        %v2281 = vshrl.u32 %v2280, 7
        %v2282 = vsub.s32 %v2279, %v2281
        %v2283 = vrot.slane %v2273, %v2282
        %v2285 = vunpack.c.l.s4 1966171168
        %v2286 = vunpack.c.0.s8 %v2285
        %v2287 = vlaneseq
        %v2288 = vshrl.u32 %v2287, 7
        %v2289 = vsub.s32 %v2286, %v2288
        %v2290 = vrot.slane %v2274, %v2289
        %v2292 = vunpack.c.l.s4 1966171168
        %v2293 = vunpack.c.0.s8 %v2292
        %v2294 = vlaneseq
        %v2295 = vshrl.u32 %v2294, 7
        %v2296 = vsub.s32 %v2293, %v2295
        %v2297 = vrot.slane %v2275, %v2296
        %v2299 = vunpack.c.l.s4 1966171168
        %v2300 = vunpack.c.0.s8 %v2299
        %v2301 = vlaneseq
        %v2302 = vshrl.u32 %v2301, 7
        %v2303 = vsub.s32 %v2300, %v2302
        %v2304 = vrot.slane %v2276, %v2303
        %v2305 = vcombine.low %v2283, %v2290
        %v2306 = vcombine.low %v2297, %v2304
        %v2308 = vunpack.c.l.s4 1966171168
        %v2309 = vunpack.c.0.s8 %v2308
        %v2310 = vlaneseq
        %v2311 = vshrl.u32 %v2310, 7
        %v2312 = vsub.s32 %v2309, %v2311
        %v2313 = vrot.slane %v2305, %v2312
        %v2315 = vunpack.c.l.s4 1966171168
        %v2316 = vunpack.c.0.s8 %v2315
        %v2317 = vlaneseq
        %v2318 = vshrl.u32 %v2317, 7
        %v2319 = vsub.s32 %v2316, %v2318
        %v2320 = vrot.slane %v2306, %v2319
        %v2321 = vcombine.low %v2313, %v2320
        %2323 = vst [vmem:[%s404] sm:$0xff] %v2321
        %s2324 = sand.u32 %s194, 1
        %s2325 = scalar_lea.sflag [#allocation4], %s2324
        %s2326 = sand.u32 %s194, 1
        %s2327 = smul.addr %s2326, 8
        %s2328 = scalar_lea.vmem [#allocation10], %s2327
        // Predicated region
        $region65: #{tpu_custom_call.1} parent=43 // pred_check
          %p2329 = pneg %p204
        $region66: #{tpu_custom_call.1} parent=43 // pred_check_branch
          %2331 = sbr.rel (%p2329) target = $region68
        $region67: #{tpu_custom_call.1} parent=43 // pred_region
          %s2332 = smul.u32 8, %s34
          %s2334 = ssub.s32 128, 128
          %2335 = vsyncadd %s2325, %s2334
          %s2336 = smul.addr %s33, 16
          %s2337 = sadd.s32 %s2332, %s2336
          %s2338 = smul.addr %s2337, 16
          %s2339 = scalar_lea.hbm %s6, %s2338
          %s2341 = sshll.u32 %s2328, 4
          %s2342 = int_to_ptr.vmem [resolvable:$true] %s2341
          %2344 = dma.vmem_to_hbm [thread:$0]  %s2342, 128, %s2339, %s2325
        $region68: #{tpu_custom_call.1} parent=43 // pred_fallthru
          _
        // Predicated region
        $region69: #{tpu_custom_call.1} parent=43 // pred_check
          %p2345 = pneg %p230
        $region70: #{tpu_custom_call.1} parent=43 // pred_check_branch
          %2347 = sbr.rel (%p2345) target = $region72
        $region71: #{tpu_custom_call.1} parent=43 // pred_region
          %s2349 = ssub.s32 32, 32
          %2350 = vsyncadd [#allocation12], %s2349
          %s2351 = smul.addr %s33, 32
          %s2352 = scalar_lea.hbm %s7, %s2351
          %s2354 = sshll.u32 [#allocation11], 4
          %s2355 = int_to_ptr.vmem [resolvable:$true] %s2354
          %2357 = dma.vmem_to_hbm [thread:$0]  %s2355, 32, %s2352, [#allocation12]
        $region72: #{tpu_custom_call.1} parent=43 // pred_fallthru
          _
        // Predicated region
        $region73: #{tpu_custom_call.1} parent=43 // pred_check
          %p2358 = pneg %p256
        $region74: #{tpu_custom_call.1} parent=43 // pred_check_branch
          %2360 = sbr.rel (%p2358) target = $region76
        $region75: #{tpu_custom_call.1} parent=43 // pred_region
          %s2362 = ssub.s32 32, 32
          %2363 = vsyncadd [#allocation12], %s2362
          %s2364 = smul.addr %s33, 32
          %s2365 = scalar_lea.hbm %s8, %s2364
          %s2367 = sshll.u32 [#allocation13], 4
          %s2368 = int_to_ptr.vmem [resolvable:$true] %s2367
          %2370 = dma.vmem_to_hbm [thread:$0]  %s2368, 32, %s2365, [#allocation12]
        $region76: #{tpu_custom_call.1} parent=43 // pred_fallthru
          _
        // Predicated region
        $region77: #{tpu_custom_call.1} parent=43 // pred_check
          %p2371 = pneg %p230
        $region78: #{tpu_custom_call.1} parent=43 // pred_check_branch
          %2373 = sbr.rel (%p2371) target = $region80
        $region79: #{tpu_custom_call.1} parent=43 // pred_region
          %2374 = dma.done [#allocation12], 32
        $region80: #{tpu_custom_call.1} parent=43 // pred_fallthru
          _
        // Predicated region
        $region81: #{tpu_custom_call.1} parent=43 // pred_check
          %p2375 = pneg %p256
        $region82: #{tpu_custom_call.1} parent=43 // pred_check_branch
          %2377 = sbr.rel (%p2375) target = $region84
        $region83: #{tpu_custom_call.1} parent=43 // pred_region
          %2378 = dma.done [#allocation12], 32
        $region84: #{tpu_custom_call.1} parent=43 // pred_fallthru
          _
      $region44: #{tpu_custom_call.1} parent=5 // pred_fallthru
        _
      %p2379 = scmp.le.s32.totalorder 2, %s24
      // Predicated region
      $region85: #{tpu_custom_call.1} parent=5 // pred_check
        %p2380 = pneg %p2379
      $region86: #{tpu_custom_call.1} parent=5 // pred_check_branch
        %2382 = sbr.rel (%p2380) target = $region88
      $region87: #{tpu_custom_call.1} parent=5 // pred_region
        %s2383 = ssub.s32 %s24, 2
        // Predicated region
        $region89: #{tpu_custom_call.1} parent=87 // pred_check
          %p2384 = pneg %p210
        $region90: #{tpu_custom_call.1} parent=87 // pred_check_branch
          %2386 = sbr.rel (%p2384) target = $region92
        $region91: #{tpu_custom_call.1} parent=87 // pred_region
          %s2387 = sand.u32 %s195, 1
          %s2388 = scalar_lea.sflag [#allocation4], %s2387
          %s2389 = sand.u32 %s195, 1
          %s2390 = smul.addr %s2389, 8
          %s2391 = scalar_lea.vmem [#allocation10], %s2390
          %2392 = dma.done %s2388, 128
        $region92: #{tpu_custom_call.1} parent=87 // pred_fallthru
          _
      $region88: #{tpu_custom_call.1} parent=5 // pred_fallthru
        _
    $region6: #{tpu_custom_call.1} parent=1 // loop_footer
      %s28 = sadd.s32 1, %s24
    $region7: #{tpu_custom_call.1} parent=1 // loop_footer_branch
      %23 = sbr.rel target = $region3
    $region8: #{tpu_custom_call.1} parent=1 // loop_exit
      _
    %2393 = vsyncpa [#allocation3], 1
    %s2394 = scalar_lea.sflag [#allocation3], 1
    %2395 = vsyncpa %s2394, 1
    %2396 = vsyncpa [#allocation6], 1
    %2397 = vsyncpa [#allocation9], 1
    %2398 = vsyncpa [#allocation4], 1
    %s2399 = scalar_lea.sflag [#allocation4], 1
    %2400 = vsyncpa %s2399, 1
    %2401 = vsyncpa [#allocation12], 1

</llo_original>
